<compile_context>
chip_gen: v7x
topology: tpu7x:2x2x1
jax: 0.10.0
libtpu: 0.0.40
codegen_flags: <defaults>
</compile_context>

<pallas_src>
import functools

import jax
import jax.numpy as jnp
from jax.experimental import pallas as pl

LANE = 128
SUBLANE = 8
COMPUTE_DTYPE = jnp.bfloat16  # MXU input dtype; set to jnp.float32 for exact f32 math.


def _round_up(n, m):
    return ((n + m - 1) // m) * m


def _pad2d(a, rows, cols):
    r, c = a.shape
    return jnp.pad(a, ((0, rows - r), (0, cols - c)))


# ----------------------------------------------------------------------------
# Fused kernel: whole autoencoder forward (encoder + merged decoders) in one
# invocation.  refs = (x, w_0 .. w_{L-1}, bias_slab, z_out, dec_out).
# layer_meta[i] = (padded_out_width, apply_relu).  All loops unroll at trace
# time; activations stay in vregs/VMEM between layers.
# ----------------------------------------------------------------------------
def _fused_ae_kernel(*refs, layer_meta, n_enc, compute_dtype):
    n_layers = len(layer_meta)
    x_ref = refs[0]
    w_refs = refs[1:1 + n_layers]
    b_ref = refs[1 + n_layers]
    z_out_ref = refs[2 + n_layers]
    dec_out_ref = refs[3 + n_layers]

    a = x_ref[...].astype(compute_dtype)
    y = None
    for i, (n_pad, relu) in enumerate(layer_meta):
        # MXU matmul with f32 accumulation.
        y = jnp.dot(a, w_refs[i][...], preferred_element_type=jnp.float32)
        # f32 epilogue (bias add + optional ReLU) on the VPU.
        y = y + b_ref[i:i + 1, :n_pad]
        if relu:
            y = jnp.maximum(y, 0.0)
        if i == n_enc - 1:
            # Encoder output (latent) — written lane-dense (128-wide, padded).
            z_out_ref[...] = y.astype(z_out_ref.dtype)
        a = y.astype(compute_dtype)
    dec_out_ref[...] = y.astype(dec_out_ref.dtype)


# ----------------------------------------------------------------------------
# Parameter construction (deterministic, synthetic — mirrors the shapes the
# nn.Linear layers in AELinearConv.__init__ would hold).  Weights stored as
# (in_features, out_features): y = x @ W + b  ==  PyTorch's x @ W_pt.T + b.
# ----------------------------------------------------------------------------
def _init_linear(key, d_in, d_out, dtype=jnp.float32):
    kw, kb = jax.random.split(key)
    scale = 1.0 / jnp.sqrt(jnp.asarray(d_in, dtype))
    w = jax.random.uniform(kw, (d_in, d_out), dtype, -scale, scale)
    b = jax.random.uniform(kb, (d_out,), dtype, -scale, scale)
    return w, b


def make_ae_params(key, latent_dim, enc_dims):
    (in1, in2), h1, h2, h3, h4 = enc_dims
    enc_sizes = [(in1, h1), (h1, h2), (h2, h3), (h3, h4), (h4, latent_dim)]
    dec1_sizes = [(latent_dim, h4), (h4, h3), (h3, h2), (h2, h1), (h1, in1)]
    dec2_sizes = [(latent_dim, h4), (h4, h3), (h3, h2), (h2, h1), (h1, in2)]

    params = {}
    for name, sizes in (("encoder", enc_sizes),
                        ("decoder1", dec1_sizes),
                        ("decoder2", dec2_sizes)):
        layers = []
        for (di, do) in sizes:
            key, sub = jax.random.split(key)
            layers.append(_init_linear(sub, di, do))
        params[name] = layers
    return params


# ----------------------------------------------------------------------------
# Pad + merge the logical per-layer params into the fused-kernel form.
# ----------------------------------------------------------------------------
def _block_diag(a, b):
    out = jnp.zeros((a.shape[0] + b.shape[0], a.shape[1] + b.shape[1]), a.dtype)
    out = out.at[:a.shape[0], :a.shape[1]].set(a)
    out = out.at[a.shape[0]:, a.shape[1]:].set(b)
    return out


def build_fused_params(params, compute_dtype=COMPUTE_DTYPE):
    enc = params["encoder"]
    d1 = params["decoder1"]
    d2 = params["decoder2"]

    # Merge decoder1/decoder2 layer-by-layer.
    merged = [(jnp.concatenate([d1[0][0], d2[0][0]], axis=1),      # both consume z
               jnp.concatenate([d1[0][1], d2[0][1]], axis=0))]
    for (w_a, b_a), (w_b, b_b) in zip(d1[1:], d2[1:]):              # independent branches
        merged.append((_block_diag(w_a, w_b), jnp.concatenate([b_a, b_b], axis=0)))

    logical = list(enc) + merged
    n_enc = len(enc)
    n_layers = len(logical)

    max_n_pad = max(_round_up(w.shape[1], LANE) for w, _ in logical)
    w_pad_list, bias_rows, layer_meta = [], [], []
    for i, (w, b) in enumerate(logical):
        k_pad = _round_up(w.shape[0], LANE)
        n_pad = _round_up(w.shape[1], LANE)
        w_pad_list.append(_pad2d(w, k_pad, n_pad).astype(compute_dtype))
        bias_rows.append(jnp.pad(b, (0, max_n_pad - b.shape[0])).astype(jnp.float32))
        relu = (i != n_enc - 1) and (i != n_layers - 1)
        layer_meta.append((n_pad, relu))
    bias_slab = jnp.stack(bias_rows, axis=0)                        # (n_layers, max_n_pad) f32
    return w_pad_list, bias_slab, tuple(layer_meta), n_enc


# ----------------------------------------------------------------------------
# Forward pass: one pallas_call for the whole network.
# ----------------------------------------------------------------------------
def ae_linear_conv_forward(params, x, latent_dim, enc_dims,
                           compute_dtype=COMPUTE_DTYPE):
    (in1, in2) = enc_dims[0]
    batch, d_in = x.shape
    assert d_in == in1

    w_list, bias_slab, layer_meta, n_enc = build_fused_params(params, compute_dtype)

    m_pad = _round_up(max(batch, SUBLANE), SUBLANE)
    k0_pad = w_list[0].shape[0]
    x_pad = _pad2d(x.astype(jnp.float32), m_pad, k0_pad)

    z_pad_n = w_list[n_enc - 1].shape[1]      # padded latent width (>=128, lane-dense)
    dec_pad_n = w_list[-1].shape[1]           # padded merged decoder output width

    kernel = functools.partial(_fused_ae_kernel, layer_meta=layer_meta,
                               n_enc=n_enc, compute_dtype=compute_dtype)

    in_arrays = (x_pad, *w_list, bias_slab)
    in_specs = [pl.BlockSpec(a.shape, lambda: (0, 0)) for a in in_arrays]
    out_specs = (pl.BlockSpec((m_pad, z_pad_n), lambda: (0, 0)),
                 pl.BlockSpec((m_pad, dec_pad_n), lambda: (0, 0)))

    z_pad, dec_pad = pl.pallas_call(
        kernel,
        out_shape=(jax.ShapeDtypeStruct((m_pad, z_pad_n), jnp.float32),
                   jax.ShapeDtypeStruct((m_pad, dec_pad_n), jnp.float32)),
        in_specs=in_specs,
        out_specs=out_specs,
    )(*in_arrays)

    # Slice padded / merged outputs back to the logical module outputs.
    z = z_pad[:batch, :latent_dim]
    r1 = dec_pad[:batch, :in1]
    r2 = dec_pad[:batch, in1:in1 + in2]
    return r1, r2, z


# ----------------------------------------------------------------------------
# Self-test
# ----------------------------------------------------------------------------
if __name__ == "__main__":
    # Small shapes consistent with the module's constructor signature:
    # AELinearConv(laten_dim=32, enc_dims=[(256, 128), 128, 128, 64, 64])
    latent_dim = 32
    enc_dims = ((256, 128), 128, 128, 64, 64)
    batch = 8

    key = jax.random.PRNGKey(0)
    key_p, key_x = jax.random.split(key)
    params = make_ae_params(key_p, latent_dim, enc_dims)
    x = jax.random.normal(key_x, (batch, enc_dims[0][0]), jnp.float32)

    fwd = jax.jit(lambda p, xx: ae_linear_conv_forward(p, xx, latent_dim, enc_dims))
    r1, r2, z = jax.block_until_ready(fwd(params, x))

    assert r1.shape == (batch, enc_dims[0][0])
    assert r2.shape == (batch, enc_dims[0][1])
    assert z.shape == (batch, latent_dim)

    # Pure-JAX reference of the same per-layer math (un-merged, un-padded),
    # parameterized by the MXU input dtype used in the kernel.
    def ref_stack(xx, layers, dtype):
        n = len(layers)
        for i, (w, b) in enumerate(layers):
            y = jnp.dot(xx.astype(dtype), w.astype(dtype),
                        preferred_element_type=jnp.float32,
                        precision=jax.lax.Precision.HIGHEST) + b.astype(jnp.float32)
            xx = jnp.maximum(y, 0.0) if i < n - 1 else y
        return xx

    def ref_forward(dtype):
        zz = ref_stack(x, params["encoder"], dtype)
        return (ref_stack(zz, params["decoder1"], dtype),
                ref_stack(zz, params["decoder2"], dtype),
                zz)

    # (1) Kernel matches a reference of identical numerics (bf16 MXU, f32 acc).
    r1_s, r2_s, z_s = ref_forward(COMPUTE_DTYPE)
    assert jnp.allclose(z, z_s, atol=2e-3, rtol=2e-3)
    assert jnp.allclose(r1, r1_s, atol=2e-3, rtol=2e-3)
    assert jnp.allclose(r2, r2_s, atol=2e-3, rtol=2e-3)

    # (2) bf16-MXU result stays close to the full-f32 module semantics.
    r1_f, r2_f, z_f = ref_forward(jnp.float32)
    assert jnp.allclose(z, z_f, atol=5e-2, rtol=5e-2)
    assert jnp.allclose(r1, r1_f, atol=5e-2, rtol=5e-2)
    assert jnp.allclose(r2, r2_f, atol=5e-2, rtol=5e-2)

    print("KERNEL_OK")
</pallas_src>

<mosaic_0001>
module attributes {stable_mosaic.version = 11 : i64} {
  func.func @_fused_ae_kernel(%arg0: memref<8x256xf32, #tpu.memory_space<vmem>>, %arg1: memref<256x128xbf16, #tpu.memory_space<vmem>>, %arg2: memref<128x128xbf16, #tpu.memory_space<vmem>>, %arg3: memref<128x128xbf16, #tpu.memory_space<vmem>>, %arg4: memref<128x128xbf16, #tpu.memory_space<vmem>>, %arg5: memref<128x128xbf16, #tpu.memory_space<vmem>>, %arg6: memref<128x128xbf16, #tpu.memory_space<vmem>>, %arg7: memref<128x128xbf16, #tpu.memory_space<vmem>>, %arg8: memref<128x256xbf16, #tpu.memory_space<vmem>>, %arg9: memref<256x256xbf16, #tpu.memory_space<vmem>>, %arg10: memref<256x384xbf16, #tpu.memory_space<vmem>>, %arg11: memref<10x384xf32, #tpu.memory_space<vmem>>, %arg12: memref<8x128xf32, #tpu.memory_space<vmem>>, %arg13: memref<8x384xf32, #tpu.memory_space<vmem>>) attributes {dimension_semantics = [], scalar_prefetch = 0 : i64, scratch_operands = 0 : i64, tpu.core_type = #tpu.core_type<tc>} {
    %c0 = arith.constant 0 : index
    %c0_0 = arith.constant 0 : index
    %0 = vector.load %arg0[%c0, %c0_0] : memref<8x256xf32, #tpu.memory_space<vmem>>, vector<8x256xf32>
    %1 = arith.truncf %0 : vector<8x256xf32> to vector<8x256xbf16>
    %c0_1 = arith.constant 0 : index
    %c0_2 = arith.constant 0 : index
    %2 = vector.load %arg1[%c0_1, %c0_2] : memref<256x128xbf16, #tpu.memory_space<vmem>>, vector<256x128xbf16>
    %cst = arith.constant dense<0.000000e+00> : vector<8x128xf32>
    %3 = tpu.matmul %1, %2, %cst {dimension_numbers = #tpu.dot_dimension_numbers<[1], [0], [0], [1], [0, 0, 1, 1], [], []>} : vector<8x256xbf16>, vector<256x128xbf16>, vector<8x128xf32> -> vector<8x128xf32>
    %c0_3 = arith.constant 0 : index
    %c0_4 = arith.constant 0 : index
    %4 = vector.load %arg11[%c0_3, %c0_4] : memref<10x384xf32, #tpu.memory_space<vmem>>, vector<1x128xf32>
    %5 = vector.broadcast %4 : vector<1x128xf32> to vector<8x128xf32>
    %6 = arith.addf %3, %5 : vector<8x128xf32>
    %cst_5 = arith.constant 0.000000e+00 : f32
    %7 = vector.broadcast %cst_5 : f32 to vector<8x128xf32>
    %8 = arith.maximumf %6, %7 : vector<8x128xf32>
    %9 = arith.truncf %8 : vector<8x128xf32> to vector<8x128xbf16>
    %c0_6 = arith.constant 0 : index
    %c0_7 = arith.constant 0 : index
    %10 = vector.load %arg2[%c0_6, %c0_7] : memref<128x128xbf16, #tpu.memory_space<vmem>>, vector<128x128xbf16>
    %cst_8 = arith.constant dense<0.000000e+00> : vector<8x128xf32>
    %11 = tpu.matmul %9, %10, %cst_8 {dimension_numbers = #tpu.dot_dimension_numbers<[1], [0], [0], [1], [0, 0, 1, 1], [], []>} : vector<8x128xbf16>, vector<128x128xbf16>, vector<8x128xf32> -> vector<8x128xf32>
    %c1 = arith.constant 1 : index
    %c0_9 = arith.constant 0 : index
    %12 = vector.load %arg11[%c1, %c0_9] : memref<10x384xf32, #tpu.memory_space<vmem>>, vector<1x128xf32>
    %13 = vector.broadcast %12 : vector<1x128xf32> to vector<8x128xf32>
    %14 = arith.addf %11, %13 : vector<8x128xf32>
    %cst_10 = arith.constant 0.000000e+00 : f32
    %15 = vector.broadcast %cst_10 : f32 to vector<8x128xf32>
    %16 = arith.maximumf %14, %15 : vector<8x128xf32>
    %17 = arith.truncf %16 : vector<8x128xf32> to vector<8x128xbf16>
    %c0_11 = arith.constant 0 : index
    %c0_12 = arith.constant 0 : index
    %18 = vector.load %arg3[%c0_11, %c0_12] : memref<128x128xbf16, #tpu.memory_space<vmem>>, vector<128x128xbf16>
    %cst_13 = arith.constant dense<0.000000e+00> : vector<8x128xf32>
    %19 = tpu.matmul %17, %18, %cst_13 {dimension_numbers = #tpu.dot_dimension_numbers<[1], [0], [0], [1], [0, 0, 1, 1], [], []>} : vector<8x128xbf16>, vector<128x128xbf16>, vector<8x128xf32> -> vector<8x128xf32>
    %c2 = arith.constant 2 : index
    %c0_14 = arith.constant 0 : index
    %20 = vector.load %arg11[%c2, %c0_14] : memref<10x384xf32, #tpu.memory_space<vmem>>, vector<1x128xf32>
    %21 = vector.broadcast %20 : vector<1x128xf32> to vector<8x128xf32>
    %22 = arith.addf %19, %21 : vector<8x128xf32>
    %cst_15 = arith.constant 0.000000e+00 : f32
    %23 = vector.broadcast %cst_15 : f32 to vector<8x128xf32>
    %24 = arith.maximumf %22, %23 : vector<8x128xf32>
    %25 = arith.truncf %24 : vector<8x128xf32> to vector<8x128xbf16>
    %c0_16 = arith.constant 0 : index
    %c0_17 = arith.constant 0 : index
    %26 = vector.load %arg4[%c0_16, %c0_17] : memref<128x128xbf16, #tpu.memory_space<vmem>>, vector<128x128xbf16>
    %cst_18 = arith.constant dense<0.000000e+00> : vector<8x128xf32>
    %27 = tpu.matmul %25, %26, %cst_18 {dimension_numbers = #tpu.dot_dimension_numbers<[1], [0], [0], [1], [0, 0, 1, 1], [], []>} : vector<8x128xbf16>, vector<128x128xbf16>, vector<8x128xf32> -> vector<8x128xf32>
    %c3 = arith.constant 3 : index
    %c0_19 = arith.constant 0 : index
    %28 = vector.load %arg11[%c3, %c0_19] : memref<10x384xf32, #tpu.memory_space<vmem>>, vector<1x128xf32>
    %29 = vector.broadcast %28 : vector<1x128xf32> to vector<8x128xf32>
    %30 = arith.addf %27, %29 : vector<8x128xf32>
    %cst_20 = arith.constant 0.000000e+00 : f32
    %31 = vector.broadcast %cst_20 : f32 to vector<8x128xf32>
    %32 = arith.maximumf %30, %31 : vector<8x128xf32>
    %33 = arith.truncf %32 : vector<8x128xf32> to vector<8x128xbf16>
    %c0_21 = arith.constant 0 : index
    %c0_22 = arith.constant 0 : index
    %34 = vector.load %arg5[%c0_21, %c0_22] : memref<128x128xbf16, #tpu.memory_space<vmem>>, vector<128x128xbf16>
    %cst_23 = arith.constant dense<0.000000e+00> : vector<8x128xf32>
    %35 = tpu.matmul %33, %34, %cst_23 {dimension_numbers = #tpu.dot_dimension_numbers<[1], [0], [0], [1], [0, 0, 1, 1], [], []>} : vector<8x128xbf16>, vector<128x128xbf16>, vector<8x128xf32> -> vector<8x128xf32>
    %c4 = arith.constant 4 : index
    %c0_24 = arith.constant 0 : index
    %36 = vector.load %arg11[%c4, %c0_24] : memref<10x384xf32, #tpu.memory_space<vmem>>, vector<1x128xf32>
    %37 = vector.broadcast %36 : vector<1x128xf32> to vector<8x128xf32>
    %38 = arith.addf %35, %37 : vector<8x128xf32>
    %c0_25 = arith.constant 0 : index
    %c0_26 = arith.constant 0 : index
    %39 = vector.load %arg12[%c0_25, %c0_26] : memref<8x128xf32, #tpu.memory_space<vmem>>, vector<8x128xf32>
    tpu.vector_store %arg12[%c0_25, %c0_26], %38 {strides = array<i32>} : memref<8x128xf32, #tpu.memory_space<vmem>>, vector<8x128xf32>,
    %40 = arith.truncf %38 : vector<8x128xf32> to vector<8x128xbf16>
    %c0_27 = arith.constant 0 : index
    %c0_28 = arith.constant 0 : index
    %41 = vector.load %arg6[%c0_27, %c0_28] : memref<128x128xbf16, #tpu.memory_space<vmem>>, vector<128x128xbf16>
    %cst_29 = arith.constant dense<0.000000e+00> : vector<8x128xf32>
    %42 = tpu.matmul %40, %41, %cst_29 {dimension_numbers = #tpu.dot_dimension_numbers<[1], [0], [0], [1], [0, 0, 1, 1], [], []>} : vector<8x128xbf16>, vector<128x128xbf16>, vector<8x128xf32> -> vector<8x128xf32>
    %c5 = arith.constant 5 : index
    %c0_30 = arith.constant 0 : index
    %43 = vector.load %arg11[%c5, %c0_30] : memref<10x384xf32, #tpu.memory_space<vmem>>, vector<1x128xf32>
    %44 = vector.broadcast %43 : vector<1x128xf32> to vector<8x128xf32>
    %45 = arith.addf %42, %44 : vector<8x128xf32>
    %cst_31 = arith.constant 0.000000e+00 : f32
    %46 = vector.broadcast %cst_31 : f32 to vector<8x128xf32>
    %47 = arith.maximumf %45, %46 : vector<8x128xf32>
    %48 = arith.truncf %47 : vector<8x128xf32> to vector<8x128xbf16>
    %c0_32 = arith.constant 0 : index
    %c0_33 = arith.constant 0 : index
    %49 = vector.load %arg7[%c0_32, %c0_33] : memref<128x128xbf16, #tpu.memory_space<vmem>>, vector<128x128xbf16>
    %cst_34 = arith.constant dense<0.000000e+00> : vector<8x128xf32>
    %50 = tpu.matmul %48, %49, %cst_34 {dimension_numbers = #tpu.dot_dimension_numbers<[1], [0], [0], [1], [0, 0, 1, 1], [], []>} : vector<8x128xbf16>, vector<128x128xbf16>, vector<8x128xf32> -> vector<8x128xf32>
    %c6 = arith.constant 6 : index
    %c0_35 = arith.constant 0 : index
    %51 = vector.load %arg11[%c6, %c0_35] : memref<10x384xf32, #tpu.memory_space<vmem>>, vector<1x128xf32>
    %52 = vector.broadcast %51 : vector<1x128xf32> to vector<8x128xf32>
    %53 = arith.addf %50, %52 : vector<8x128xf32>
    %cst_36 = arith.constant 0.000000e+00 : f32
    %54 = vector.broadcast %cst_36 : f32 to vector<8x128xf32>
    %55 = arith.maximumf %53, %54 : vector<8x128xf32>
    %56 = arith.truncf %55 : vector<8x128xf32> to vector<8x128xbf16>
    %c0_37 = arith.constant 0 : index
    %c0_38 = arith.constant 0 : index
    %57 = vector.load %arg8[%c0_37, %c0_38] : memref<128x256xbf16, #tpu.memory_space<vmem>>, vector<128x256xbf16>
    %cst_39 = arith.constant dense<0.000000e+00> : vector<8x256xf32>
    %58 = tpu.matmul %56, %57, %cst_39 {dimension_numbers = #tpu.dot_dimension_numbers<[1], [0], [0], [1], [0, 0, 1, 1], [], []>} : vector<8x128xbf16>, vector<128x256xbf16>, vector<8x256xf32> -> vector<8x256xf32>
    %c7 = arith.constant 7 : index
    %c0_40 = arith.constant 0 : index
    %59 = vector.load %arg11[%c7, %c0_40] : memref<10x384xf32, #tpu.memory_space<vmem>>, vector<1x256xf32>
    %60 = vector.broadcast %59 : vector<1x256xf32> to vector<8x256xf32>
    %61 = arith.addf %58, %60 : vector<8x256xf32>
    %cst_41 = arith.constant 0.000000e+00 : f32
    %62 = vector.broadcast %cst_41 : f32 to vector<8x256xf32>
    %63 = arith.maximumf %61, %62 : vector<8x256xf32>
    %64 = arith.truncf %63 : vector<8x256xf32> to vector<8x256xbf16>
    %c0_42 = arith.constant 0 : index
    %c0_43 = arith.constant 0 : index
    %65 = vector.load %arg9[%c0_42, %c0_43] : memref<256x256xbf16, #tpu.memory_space<vmem>>, vector<256x256xbf16>
    %cst_44 = arith.constant dense<0.000000e+00> : vector<8x256xf32>
    %66 = tpu.matmul %64, %65, %cst_44 {dimension_numbers = #tpu.dot_dimension_numbers<[1], [0], [0], [1], [0, 0, 1, 1], [], []>} : vector<8x256xbf16>, vector<256x256xbf16>, vector<8x256xf32> -> vector<8x256xf32>
    %c8 = arith.constant 8 : index
    %c0_45 = arith.constant 0 : index
    %67 = vector.load %arg11[%c8, %c0_45] : memref<10x384xf32, #tpu.memory_space<vmem>>, vector<1x256xf32>
    %68 = vector.broadcast %67 : vector<1x256xf32> to vector<8x256xf32>
    %69 = arith.addf %66, %68 : vector<8x256xf32>
    %cst_46 = arith.constant 0.000000e+00 : f32
    %70 = vector.broadcast %cst_46 : f32 to vector<8x256xf32>
    %71 = arith.maximumf %69, %70 : vector<8x256xf32>
    %72 = arith.truncf %71 : vector<8x256xf32> to vector<8x256xbf16>
    %c0_47 = arith.constant 0 : index
    %c0_48 = arith.constant 0 : index
    %73 = vector.load %arg10[%c0_47, %c0_48] : memref<256x384xbf16, #tpu.memory_space<vmem>>, vector<256x384xbf16>
    %cst_49 = arith.constant dense<0.000000e+00> : vector<8x384xf32>
    %74 = tpu.matmul %72, %73, %cst_49 {dimension_numbers = #tpu.dot_dimension_numbers<[1], [0], [0], [1], [0, 0, 1, 1], [], []>} : vector<8x256xbf16>, vector<256x384xbf16>, vector<8x384xf32> -> vector<8x384xf32>
    %c9 = arith.constant 9 : index
    %c0_50 = arith.constant 0 : index
    %75 = vector.load %arg11[%c9, %c0_50] : memref<10x384xf32, #tpu.memory_space<vmem>>, vector<1x384xf32>
    %76 = vector.broadcast %75 : vector<1x384xf32> to vector<8x384xf32>
    %77 = arith.addf %74, %76 : vector<8x384xf32>
    %c0_51 = arith.constant 0 : index
    %c0_52 = arith.constant 0 : index
    %78 = vector.load %arg13[%c0_51, %c0_52] : memref<8x384xf32, #tpu.memory_space<vmem>>, vector<8x384xf32>
    tpu.vector_store %arg13[%c0_51, %c0_52], %77 {strides = array<i32>} : memref<8x384xf32, #tpu.memory_space<vmem>>, vector<8x384xf32>,
    return
  }
}

</mosaic_0001>

<llo_original>
// kernel: _lambda_.1
$region0: #{_lambda_.1}
  #allocation0 [shape = 'u32[]', space=smem, size = 0x4, offset = 0x4, fixed_abs, tag = 'smem constant byte address 0x4 - core index']
  #allocation1 [shape = 'u32[144,128]{1,0:T(1,128)}', space=vmem, size = 0x12000, scoped, tag = 'internal scratch']
  %s0 = inlined_call_operand.vmem [shape: f32[8,256], index: 0, kind: input, shape index: {}]
  %s1 = inlined_call_operand.vmem [shape: bf16[256,128], index: 1, kind: input, shape index: {}]
  %s2 = inlined_call_operand.vmem [shape: bf16[128,128], index: 2, kind: input, shape index: {}]
  %s3 = inlined_call_operand.vmem [shape: bf16[128,128], index: 3, kind: input, shape index: {}]
  %s4 = inlined_call_operand.vmem [shape: bf16[128,128], index: 4, kind: input, shape index: {}]
  %s5 = inlined_call_operand.vmem [shape: bf16[128,128], index: 5, kind: input, shape index: {}]
  %s6 = inlined_call_operand.vmem [shape: bf16[128,128], index: 6, kind: input, shape index: {}]
  %s7 = inlined_call_operand.vmem [shape: bf16[128,128], index: 7, kind: input, shape index: {}]
  %s8 = inlined_call_operand.vmem [shape: bf16[128,256], index: 8, kind: input, shape index: {}]
  %s9 = inlined_call_operand.vmem [shape: bf16[256,256], index: 9, kind: input, shape index: {}]
  %s10 = inlined_call_operand.vmem [shape: bf16[256,384], index: 10, kind: input, shape index: {}]
  %s11 = inlined_call_operand.vmem [shape: f32[10,384], index: 11, kind: input, shape index: {}]
  %s12 = inlined_call_operand.hbm [shape: f32[8,128], index: 12, kind: output, shape index: {0}]
  %s13 = inlined_call_operand.vmem [shape: f32[8,384], index: 13, kind: output, shape index: {1}]
  %14 = xla_tuple %s12, %s13
  %s15 = sld [smem:[#allocation0]]
  $region66: #{_lambda_.1} parent=0
    _
  %s17 = ssub.s32 1, %s15
  %s18 = scalar_select 0, %s17, %s15
  $region1: #{_lambda_.1} parent=0
    #allocation2 [shape = 'u8[4096]{0}', space=vmem, size = 0x1000, scoped, tag = 'output window, operand 0, single buffered']
    #allocation3 [shape = 's32[1]{0}', space=sflag, size = 0x4, scoped, tag = 'scoped memory for _lambda_.1']
    %19 = vsyncpa [#allocation3], 0
    // Predicated region
    $region2: #{_lambda_.1} parent=1 // pred_check
      _
    $region3: #{_lambda_.1} parent=1 // pred_check_branch
      %21 = sbr.rel (0) target = $region5
    $region4: #{_lambda_.1} parent=1 // pred_region
      _
    $region5: #{_lambda_.1} parent=1 // pred_fallthru
      _
    // Predicated region
    $region6: #{_lambda_.1} parent=1 // pred_check
      _
    $region7: #{_lambda_.1} parent=1 // pred_check_branch
      %23 = sbr.rel (0) target = $region9
    $region8: #{_lambda_.1} parent=1 // pred_region
      _
    $region9: #{_lambda_.1} parent=1 // pred_fallthru
      _
    // Predicated region
    $region10: #{_lambda_.1} parent=1 // pred_check
      _
    $region11: #{_lambda_.1} parent=1 // pred_check_branch
      %25 = sbr.rel (0) target = $region13
    $region12: #{_lambda_.1} parent=1 // pred_region
      _
    $region13: #{_lambda_.1} parent=1 // pred_fallthru
      _
    // Predicated region
    $region14: #{_lambda_.1} parent=1 // pred_check
      _
    $region15: #{_lambda_.1} parent=1 // pred_check_branch
      %27 = sbr.rel (0) target = $region17
    $region16: #{_lambda_.1} parent=1 // pred_region
      _
    $region17: #{_lambda_.1} parent=1 // pred_fallthru
      _
    // Predicated region
    $region18: #{_lambda_.1} parent=1 // pred_check
      _
    $region19: #{_lambda_.1} parent=1 // pred_check_branch
      %29 = sbr.rel (0) target = $region21
    $region20: #{_lambda_.1} parent=1 // pred_region
      _
    $region21: #{_lambda_.1} parent=1 // pred_fallthru
      _
    // Predicated region
    $region22: #{_lambda_.1} parent=1 // pred_check
      _
    $region23: #{_lambda_.1} parent=1 // pred_check_branch
      %31 = sbr.rel (0) target = $region25
    $region24: #{_lambda_.1} parent=1 // pred_region
      _
    $region25: #{_lambda_.1} parent=1 // pred_fallthru
      _
    // Predicated region
    $region26: #{_lambda_.1} parent=1 // pred_check
      _
    $region27: #{_lambda_.1} parent=1 // pred_check_branch
      %33 = sbr.rel (0) target = $region29
    $region28: #{_lambda_.1} parent=1 // pred_region
      _
    $region29: #{_lambda_.1} parent=1 // pred_fallthru
      _
    // Predicated region
    $region30: #{_lambda_.1} parent=1 // pred_check
      _
    $region31: #{_lambda_.1} parent=1 // pred_check_branch
      %35 = sbr.rel (0) target = $region33
    $region32: #{_lambda_.1} parent=1 // pred_region
      _
    $region33: #{_lambda_.1} parent=1 // pred_fallthru
      _
    // Predicated region
    $region34: #{_lambda_.1} parent=1 // pred_check
      _
    $region35: #{_lambda_.1} parent=1 // pred_check_branch
      %37 = sbr.rel (0) target = $region37
    $region36: #{_lambda_.1} parent=1 // pred_region
      _
    $region37: #{_lambda_.1} parent=1 // pred_fallthru
      _
    // Predicated region
    $region38: #{_lambda_.1} parent=1 // pred_check
      _
    $region39: #{_lambda_.1} parent=1 // pred_check_branch
      %39 = sbr.rel (0) target = $region41
    $region40: #{_lambda_.1} parent=1 // pred_region
      _
    $region41: #{_lambda_.1} parent=1 // pred_fallthru
      _
    // Predicated region
    $region42: #{_lambda_.1} parent=1 // pred_check
      _
    $region43: #{_lambda_.1} parent=1 // pred_check_branch
      %41 = sbr.rel (0) target = $region45
    $region44: #{_lambda_.1} parent=1 // pred_region
      _
    $region45: #{_lambda_.1} parent=1 // pred_fallthru
      _
    // Predicated region
    $region46: #{_lambda_.1} parent=1 // pred_check
      _
    $region47: #{_lambda_.1} parent=1 // pred_check_branch
      %43 = sbr.rel (0) target = $region49
    $region48: #{_lambda_.1} parent=1 // pred_region
      _
    $region49: #{_lambda_.1} parent=1 // pred_fallthru
      _
    %v45 = vld [vmem:[%s0] sm:$0xff]
    %v46 = vld [vmem:[%s0 + $0x8] sm:$0xff]
    %v47 = vpack.c.bf16 %v45, %v45
    %v48 = vpack.c.bf16 %v46, %v46
    %v49 = vld [vmem:[%s1] sm:$0xf]
    %v50 = vld [vmem:[%s1 + $0x4] sm:$0xf]
    %v51 = vld [vmem:[%s1 + $0x8] sm:$0xf]
    %v52 = vld [vmem:[%s1 + $0xc] sm:$0xf]
    %v53 = vld [vmem:[%s1 + $0x10] sm:$0xf]
    %v54 = vld [vmem:[%s1 + $0x14] sm:$0xf]
    %v55 = vld [vmem:[%s1 + $0x18] sm:$0xf]
    %v56 = vld [vmem:[%s1 + $0x1c] sm:$0xf]
    %v57 = vld [vmem:[%s1 + $0x20] sm:$0xf]
    %v58 = vld [vmem:[%s1 + $0x24] sm:$0xf]
    %v59 = vld [vmem:[%s1 + $0x28] sm:$0xf]
    %v60 = vld [vmem:[%s1 + $0x2c] sm:$0xf]
    %v61 = vld [vmem:[%s1 + $0x30] sm:$0xf]
    %v62 = vld [vmem:[%s1 + $0x34] sm:$0xf]
    %v63 = vld [vmem:[%s1 + $0x38] sm:$0xf]
    %v64 = vld [vmem:[%s1 + $0x3c] sm:$0xf]
    %v65 = vld [vmem:[%s1 + $0x40] sm:$0xf]
    %v66 = vld [vmem:[%s1 + $0x44] sm:$0xf]
    %v67 = vld [vmem:[%s1 + $0x48] sm:$0xf]
    %v68 = vld [vmem:[%s1 + $0x4c] sm:$0xf]
    %v69 = vld [vmem:[%s1 + $0x50] sm:$0xf]
    %v70 = vld [vmem:[%s1 + $0x54] sm:$0xf]
    %v71 = vld [vmem:[%s1 + $0x58] sm:$0xf]
    %v72 = vld [vmem:[%s1 + $0x5c] sm:$0xf]
    %v73 = vld [vmem:[%s1 + $0x60] sm:$0xf]
    %v74 = vld [vmem:[%s1 + $0x64] sm:$0xf]
    %v75 = vld [vmem:[%s1 + $0x68] sm:$0xf]
    %v76 = vld [vmem:[%s1 + $0x6c] sm:$0xf]
    %v77 = vld [vmem:[%s1 + $0x70] sm:$0xf]
    %v78 = vld [vmem:[%s1 + $0x74] sm:$0xf]
    %v79 = vld [vmem:[%s1 + $0x78] sm:$0xf]
    %v80 = vld [vmem:[%s1 + $0x7c] sm:$0xf]
    %v81 = vld [vmem:[%s11] ss:$0 sm:$0xff]
    %v114 = vunpack.c.l.b16 %v49
    %v115 = vunpack.c.l.b16 %v50
    %v116 = vunpack.c.l.b16 %v51
    %v117 = vunpack.c.l.b16 %v52
    %v118 = vunpack.c.l.b16 %v53
    %v119 = vunpack.c.l.b16 %v54
    %v120 = vunpack.c.l.b16 %v55
    %v121 = vunpack.c.l.b16 %v56
    %v122 = vunpack.c.l.b16 %v57
    %v123 = vunpack.c.l.b16 %v58
    %v124 = vunpack.c.l.b16 %v59
    %v125 = vunpack.c.l.b16 %v60
    %v126 = vunpack.c.l.b16 %v61
    %v127 = vunpack.c.l.b16 %v62
    %v128 = vunpack.c.l.b16 %v63
    %v129 = vunpack.c.l.b16 %v64
    %v130 = vunpack.c.l.b16 %v65
    %v131 = vunpack.c.l.b16 %v66
    %v132 = vunpack.c.l.b16 %v67
    %v133 = vunpack.c.l.b16 %v68
    %v134 = vunpack.c.l.b16 %v69
    %v135 = vunpack.c.l.b16 %v70
    %v136 = vunpack.c.l.b16 %v71
    %v137 = vunpack.c.l.b16 %v72
    %v138 = vunpack.c.l.b16 %v73
    %v139 = vunpack.c.l.b16 %v74
    %v140 = vunpack.c.l.b16 %v75
    %v141 = vunpack.c.l.b16 %v76
    %v142 = vunpack.c.l.b16 %v77
    %v143 = vunpack.c.l.b16 %v78
    %v144 = vunpack.c.l.b16 %v79
    %v145 = vunpack.c.l.b16 %v80
    %v146 = vpack.c.b16 %v115, %v114
    %v147 = vpack.c.b16 %v117, %v116
    %v148 = vpack.c.b16 %v119, %v118
    %v149 = vpack.c.b16 %v121, %v120
    %v150 = vpack.c.b16 %v123, %v122
    %v151 = vpack.c.b16 %v125, %v124
    %v152 = vpack.c.b16 %v127, %v126
    %v153 = vpack.c.b16 %v129, %v128
    %v154 = vpack.c.b16 %v131, %v130
    %v155 = vpack.c.b16 %v133, %v132
    %v156 = vpack.c.b16 %v135, %v134
    %v157 = vpack.c.b16 %v137, %v136
    %v158 = vpack.c.b16 %v139, %v138
    %v159 = vpack.c.b16 %v141, %v140
    %v160 = vpack.c.b16 %v143, %v142
    %v161 = vpack.c.b16 %v145, %v144
    %178 = vmatprep.subr.bf16.mxu0 0
    %179 = vmatpush1.bf16.msra.mxu0 %v146
    %180 = vmatprep.subr.bf16.mxu0 0
    %181 = vmatpush1.bf16.msra.mxu0 %v147
    %182 = vmatprep.subr.bf16.mxu0 0
    %183 = vmatpush1.bf16.msra.mxu0 %v148
    %184 = vmatprep.subr.bf16.mxu0 0
    %185 = vmatpush1.bf16.msra.mxu0 %v149
    %186 = vmatprep.subr.bf16.mxu0 0
    %187 = vmatpush1.bf16.msra.mxu0 %v150
    %188 = vmatprep.subr.bf16.mxu0 0
    %189 = vmatpush1.bf16.msra.mxu0 %v151
    %190 = vmatprep.subr.bf16.mxu0 0
    %191 = vmatpush1.bf16.msra.mxu0 %v152
    %192 = vmatprep.subr.bf16.mxu0 0
    %193 = vmatpush1.bf16.msra.mxu0 %v153
    %194 = vmatprep.subr.bf16.mxu0 0
    %195 = vmatpush1.bf16.msra.mxu0 %v154
    %196 = vmatprep.subr.bf16.mxu0 0
    %197 = vmatpush1.bf16.msra.mxu0 %v155
    %198 = vmatprep.subr.bf16.mxu0 0
    %199 = vmatpush1.bf16.msra.mxu0 %v156
    %200 = vmatprep.subr.bf16.mxu0 0
    %201 = vmatpush1.bf16.msra.mxu0 %v157
    %202 = vmatprep.subr.bf16.mxu0 0
    %203 = vmatpush1.bf16.msra.mxu0 %v158
    %204 = vmatprep.subr.bf16.mxu0 0
    %205 = vmatpush1.bf16.msra.mxu0 %v159
    %206 = vmatprep.subr.bf16.mxu0 0
    %207 = vmatpush1.bf16.msra.mxu0 %v160
    %208 = vmatprep.subr.bf16.mxu0 0
    %209 = vmatpush1.bf16.msra.mxu0 %v161
    %210 = vmatprep.mubr.bf16.mxu0 %v48
    %211 = vmatmul.mubr.bf16.gmra.mrb[0].mxu0 %v47
    %v212 = vpop.f32.mrb[0].mxu0
    %v213 = vadd.f32 %v81, %v212
    %v214 = vpop.f32.mrb[0].mxu0
    %v215 = vpop.f32.mrb[0].mxu0
    %v216 = vpop.f32.mrb[0].mxu0
    %217 = vdwg.mxu0
    %v218 = vmax.f32 %v213, 0.0
    %v219 = vpack.c.bf16 %v218, %v218
    %v220 = vld [vmem:[%s2] sm:$0xf]
    %v221 = vld [vmem:[%s2 + $0x4] sm:$0xf]
    %v222 = vld [vmem:[%s2 + $0x8] sm:$0xf]
    %v223 = vld [vmem:[%s2 + $0xc] sm:$0xf]
    %v224 = vld [vmem:[%s2 + $0x10] sm:$0xf]
    %v225 = vld [vmem:[%s2 + $0x14] sm:$0xf]
    %v226 = vld [vmem:[%s2 + $0x18] sm:$0xf]
    %v227 = vld [vmem:[%s2 + $0x1c] sm:$0xf]
    %v228 = vld [vmem:[%s2 + $0x20] sm:$0xf]
    %v229 = vld [vmem:[%s2 + $0x24] sm:$0xf]
    %v230 = vld [vmem:[%s2 + $0x28] sm:$0xf]
    %v231 = vld [vmem:[%s2 + $0x2c] sm:$0xf]
    %v232 = vld [vmem:[%s2 + $0x30] sm:$0xf]
    %v233 = vld [vmem:[%s2 + $0x34] sm:$0xf]
    %v234 = vld [vmem:[%s2 + $0x38] sm:$0xf]
    %v235 = vld [vmem:[%s2 + $0x3c] sm:$0xf]
    %v236 = vld [vmem:[%s11 + $0x1] ss:$0 sm:$0xff]
    %v253 = vunpack.c.l.b16 %v220
    %v254 = vunpack.c.l.b16 %v221
    %v255 = vunpack.c.l.b16 %v222
    %v256 = vunpack.c.l.b16 %v223
    %v257 = vunpack.c.l.b16 %v224
    %v258 = vunpack.c.l.b16 %v225
    %v259 = vunpack.c.l.b16 %v226
    %v260 = vunpack.c.l.b16 %v227
    %v261 = vunpack.c.l.b16 %v228
    %v262 = vunpack.c.l.b16 %v229
    %v263 = vunpack.c.l.b16 %v230
    %v264 = vunpack.c.l.b16 %v231
    %v265 = vunpack.c.l.b16 %v232
    %v266 = vunpack.c.l.b16 %v233
    %v267 = vunpack.c.l.b16 %v234
    %v268 = vunpack.c.l.b16 %v235
    %v269 = vpack.c.b16 %v254, %v253
    %v270 = vpack.c.b16 %v256, %v255
    %v271 = vpack.c.b16 %v258, %v257
    %v272 = vpack.c.b16 %v260, %v259
    %v273 = vpack.c.b16 %v262, %v261
    %v274 = vpack.c.b16 %v264, %v263
    %v275 = vpack.c.b16 %v266, %v265
    %v276 = vpack.c.b16 %v268, %v267
    %285 = vmatprep.subr.bf16.mxu0 0
    %286 = vmatpush1.bf16.msra.mxu0 %v269
    %287 = vmatprep.subr.bf16.mxu0 0
    %288 = vmatpush1.bf16.msra.mxu0 %v270
    %289 = vmatprep.subr.bf16.mxu0 0
    %290 = vmatpush1.bf16.msra.mxu0 %v271
    %291 = vmatprep.subr.bf16.mxu0 0
    %292 = vmatpush1.bf16.msra.mxu0 %v272
    %293 = vmatprep.subr.bf16.mxu0 0
    %294 = vmatpush1.bf16.msra.mxu0 %v273
    %295 = vmatprep.subr.bf16.mxu0 0
    %296 = vmatpush1.bf16.msra.mxu0 %v274
    %297 = vmatprep.subr.bf16.mxu0 0
    %298 = vmatpush1.bf16.msra.mxu0 %v275
    %299 = vmatprep.subr.bf16.mxu0 0
    %300 = vmatpush1.bf16.msra.mxu0 %v276
    %301 = vmatprep.subr.bf16.mxu0 0
    %302 = vmatpush1.bf16.msra.mxu0 0
    %303 = vmatprep.subr.bf16.mxu0 0
    %304 = vmatpush1.bf16.msra.mxu0 0
    %305 = vmatprep.subr.bf16.mxu0 0
    %306 = vmatpush1.bf16.msra.mxu0 0
    %307 = vmatprep.subr.bf16.mxu0 0
    %308 = vmatpush1.bf16.msra.mxu0 0
    %309 = vmatprep.subr.bf16.mxu0 0
    %310 = vmatpush1.bf16.msra.mxu0 0
    %311 = vmatprep.subr.bf16.mxu0 0
    %312 = vmatpush1.bf16.msra.mxu0 0
    %313 = vmatprep.subr.bf16.mxu0 0
    %314 = vmatpush1.bf16.msra.mxu0 0
    %315 = vmatprep.subr.bf16.mxu0 0
    %316 = vmatpush1.bf16.msra.mxu0 0
    %317 = vmatprep.mubr.bf16.mxu0 0
    %318 = vmatmul.mubr.bf16.gmra.mrb[0].mxu0 %v219
    %v319 = vpop.f32.mrb[0].mxu0
    %v320 = vadd.f32 %v236, %v319
    %v321 = vpop.f32.mrb[0].mxu0
    %v322 = vpop.f32.mrb[0].mxu0
    %v323 = vpop.f32.mrb[0].mxu0
    %324 = vdwg.mxu0
    %v325 = vmax.f32 %v320, 0.0
    %v326 = vpack.c.bf16 %v325, %v325
    %v327 = vld [vmem:[%s3] sm:$0xf]
    %v328 = vld [vmem:[%s3 + $0x4] sm:$0xf]
    %v329 = vld [vmem:[%s3 + $0x8] sm:$0xf]
    %v330 = vld [vmem:[%s3 + $0xc] sm:$0xf]
    %v331 = vld [vmem:[%s3 + $0x10] sm:$0xf]
    %v332 = vld [vmem:[%s3 + $0x14] sm:$0xf]
    %v333 = vld [vmem:[%s3 + $0x18] sm:$0xf]
    %v334 = vld [vmem:[%s3 + $0x1c] sm:$0xf]
    %v335 = vld [vmem:[%s3 + $0x20] sm:$0xf]
    %v336 = vld [vmem:[%s3 + $0x24] sm:$0xf]
    %v337 = vld [vmem:[%s3 + $0x28] sm:$0xf]
    %v338 = vld [vmem:[%s3 + $0x2c] sm:$0xf]
    %v339 = vld [vmem:[%s3 + $0x30] sm:$0xf]
    %v340 = vld [vmem:[%s3 + $0x34] sm:$0xf]
    %v341 = vld [vmem:[%s3 + $0x38] sm:$0xf]
    %v342 = vld [vmem:[%s3 + $0x3c] sm:$0xf]
    %v343 = vld [vmem:[%s11 + $0x2] ss:$0 sm:$0xff]
    %v360 = vunpack.c.l.b16 %v327
    %v361 = vunpack.c.l.b16 %v328
    %v362 = vunpack.c.l.b16 %v329
    %v363 = vunpack.c.l.b16 %v330
    %v364 = vunpack.c.l.b16 %v331
    %v365 = vunpack.c.l.b16 %v332
    %v366 = vunpack.c.l.b16 %v333
    %v367 = vunpack.c.l.b16 %v334
    %v368 = vunpack.c.l.b16 %v335
    %v369 = vunpack.c.l.b16 %v336
    %v370 = vunpack.c.l.b16 %v337
    %v371 = vunpack.c.l.b16 %v338
    %v372 = vunpack.c.l.b16 %v339
    %v373 = vunpack.c.l.b16 %v340
    %v374 = vunpack.c.l.b16 %v341
    %v375 = vunpack.c.l.b16 %v342
    %v376 = vpack.c.b16 %v361, %v360
    %v377 = vpack.c.b16 %v363, %v362
    %v378 = vpack.c.b16 %v365, %v364
    %v379 = vpack.c.b16 %v367, %v366
    %v380 = vpack.c.b16 %v369, %v368
    %v381 = vpack.c.b16 %v371, %v370
    %v382 = vpack.c.b16 %v373, %v372
    %v383 = vpack.c.b16 %v375, %v374
    %392 = vmatprep.subr.bf16.mxu0 0
    %393 = vmatpush1.bf16.msra.mxu0 %v376
    %394 = vmatprep.subr.bf16.mxu0 0
    %395 = vmatpush1.bf16.msra.mxu0 %v377
    %396 = vmatprep.subr.bf16.mxu0 0
    %397 = vmatpush1.bf16.msra.mxu0 %v378
    %398 = vmatprep.subr.bf16.mxu0 0
    %399 = vmatpush1.bf16.msra.mxu0 %v379
    %400 = vmatprep.subr.bf16.mxu0 0
    %401 = vmatpush1.bf16.msra.mxu0 %v380
    %402 = vmatprep.subr.bf16.mxu0 0
    %403 = vmatpush1.bf16.msra.mxu0 %v381
    %404 = vmatprep.subr.bf16.mxu0 0
    %405 = vmatpush1.bf16.msra.mxu0 %v382
    %406 = vmatprep.subr.bf16.mxu0 0
    %407 = vmatpush1.bf16.msra.mxu0 %v383
    %408 = vmatprep.subr.bf16.mxu0 0
    %409 = vmatpush1.bf16.msra.mxu0 0
    %410 = vmatprep.subr.bf16.mxu0 0
    %411 = vmatpush1.bf16.msra.mxu0 0
    %412 = vmatprep.subr.bf16.mxu0 0
    %413 = vmatpush1.bf16.msra.mxu0 0
    %414 = vmatprep.subr.bf16.mxu0 0
    %415 = vmatpush1.bf16.msra.mxu0 0
    %416 = vmatprep.subr.bf16.mxu0 0
    %417 = vmatpush1.bf16.msra.mxu0 0
    %418 = vmatprep.subr.bf16.mxu0 0
    %419 = vmatpush1.bf16.msra.mxu0 0
    %420 = vmatprep.subr.bf16.mxu0 0
    %421 = vmatpush1.bf16.msra.mxu0 0
    %422 = vmatprep.subr.bf16.mxu0 0
    %423 = vmatpush1.bf16.msra.mxu0 0
    %424 = vmatprep.mubr.bf16.mxu0 0
    %425 = vmatmul.mubr.bf16.gmra.mrb[0].mxu0 %v326
    %v426 = vpop.f32.mrb[0].mxu0
    %v427 = vadd.f32 %v343, %v426
    %v428 = vpop.f32.mrb[0].mxu0
    %v429 = vpop.f32.mrb[0].mxu0
    %v430 = vpop.f32.mrb[0].mxu0
    %431 = vdwg.mxu0
    %v432 = vmax.f32 %v427, 0.0
    %v433 = vpack.c.bf16 %v432, %v432
    %v434 = vld [vmem:[%s4] sm:$0xf]
    %v435 = vld [vmem:[%s4 + $0x4] sm:$0xf]
    %v436 = vld [vmem:[%s4 + $0x8] sm:$0xf]
    %v437 = vld [vmem:[%s4 + $0xc] sm:$0xf]
    %v438 = vld [vmem:[%s4 + $0x10] sm:$0xf]
    %v439 = vld [vmem:[%s4 + $0x14] sm:$0xf]
    %v440 = vld [vmem:[%s4 + $0x18] sm:$0xf]
    %v441 = vld [vmem:[%s4 + $0x1c] sm:$0xf]
    %v442 = vld [vmem:[%s4 + $0x20] sm:$0xf]
    %v443 = vld [vmem:[%s4 + $0x24] sm:$0xf]
    %v444 = vld [vmem:[%s4 + $0x28] sm:$0xf]
    %v445 = vld [vmem:[%s4 + $0x2c] sm:$0xf]
    %v446 = vld [vmem:[%s4 + $0x30] sm:$0xf]
    %v447 = vld [vmem:[%s4 + $0x34] sm:$0xf]
    %v448 = vld [vmem:[%s4 + $0x38] sm:$0xf]
    %v449 = vld [vmem:[%s4 + $0x3c] sm:$0xf]
    %v450 = vld [vmem:[%s11 + $0x3] ss:$0 sm:$0xff]
    %v467 = vunpack.c.l.b16 %v434
    %v468 = vunpack.c.l.b16 %v435
    %v469 = vunpack.c.l.b16 %v436
    %v470 = vunpack.c.l.b16 %v437
    %v471 = vunpack.c.l.b16 %v438
    %v472 = vunpack.c.l.b16 %v439
    %v473 = vunpack.c.l.b16 %v440
    %v474 = vunpack.c.l.b16 %v441
    %v475 = vunpack.c.l.b16 %v442
    %v476 = vunpack.c.l.b16 %v443
    %v477 = vunpack.c.l.b16 %v444
    %v478 = vunpack.c.l.b16 %v445
    %v479 = vunpack.c.l.b16 %v446
    %v480 = vunpack.c.l.b16 %v447
    %v481 = vunpack.c.l.b16 %v448
    %v482 = vunpack.c.l.b16 %v449
    %v483 = vpack.c.b16 %v468, %v467
    %v484 = vpack.c.b16 %v470, %v469
    %v485 = vpack.c.b16 %v472, %v471
    %v486 = vpack.c.b16 %v474, %v473
    %v487 = vpack.c.b16 %v476, %v475
    %v488 = vpack.c.b16 %v478, %v477
    %v489 = vpack.c.b16 %v480, %v479
    %v490 = vpack.c.b16 %v482, %v481
    %499 = vmatprep.subr.bf16.mxu0 0
    %500 = vmatpush1.bf16.msra.mxu0 %v483
    %501 = vmatprep.subr.bf16.mxu0 0
    %502 = vmatpush1.bf16.msra.mxu0 %v484
    %503 = vmatprep.subr.bf16.mxu0 0
    %504 = vmatpush1.bf16.msra.mxu0 %v485
    %505 = vmatprep.subr.bf16.mxu0 0
    %506 = vmatpush1.bf16.msra.mxu0 %v486
    %507 = vmatprep.subr.bf16.mxu0 0
    %508 = vmatpush1.bf16.msra.mxu0 %v487
    %509 = vmatprep.subr.bf16.mxu0 0
    %510 = vmatpush1.bf16.msra.mxu0 %v488
    %511 = vmatprep.subr.bf16.mxu0 0
    %512 = vmatpush1.bf16.msra.mxu0 %v489
    %513 = vmatprep.subr.bf16.mxu0 0
    %514 = vmatpush1.bf16.msra.mxu0 %v490
    %515 = vmatprep.subr.bf16.mxu0 0
    %516 = vmatpush1.bf16.msra.mxu0 0
    %517 = vmatprep.subr.bf16.mxu0 0
    %518 = vmatpush1.bf16.msra.mxu0 0
    %519 = vmatprep.subr.bf16.mxu0 0
    %520 = vmatpush1.bf16.msra.mxu0 0
    %521 = vmatprep.subr.bf16.mxu0 0
    %522 = vmatpush1.bf16.msra.mxu0 0
    %523 = vmatprep.subr.bf16.mxu0 0
    %524 = vmatpush1.bf16.msra.mxu0 0
    %525 = vmatprep.subr.bf16.mxu0 0
    %526 = vmatpush1.bf16.msra.mxu0 0
    %527 = vmatprep.subr.bf16.mxu0 0
    %528 = vmatpush1.bf16.msra.mxu0 0
    %529 = vmatprep.subr.bf16.mxu0 0
    %530 = vmatpush1.bf16.msra.mxu0 0
    %531 = vmatprep.mubr.bf16.mxu0 0
    %532 = vmatmul.mubr.bf16.gmra.mrb[0].mxu0 %v433
    %v533 = vpop.f32.mrb[0].mxu0
    %v534 = vadd.f32 %v450, %v533
    %v535 = vpop.f32.mrb[0].mxu0
    %v536 = vpop.f32.mrb[0].mxu0
    %v537 = vpop.f32.mrb[0].mxu0
    %538 = vdwg.mxu0
    %v539 = vmax.f32 %v534, 0.0
    %v540 = vpack.c.bf16 %v539, %v539
    %v541 = vld [vmem:[%s5] sm:$0xf]
    %v542 = vld [vmem:[%s5 + $0x4] sm:$0xf]
    %v543 = vld [vmem:[%s5 + $0x8] sm:$0xf]
    %v544 = vld [vmem:[%s5 + $0xc] sm:$0xf]
    %v545 = vld [vmem:[%s5 + $0x10] sm:$0xf]
    %v546 = vld [vmem:[%s5 + $0x14] sm:$0xf]
    %v547 = vld [vmem:[%s5 + $0x18] sm:$0xf]
    %v548 = vld [vmem:[%s5 + $0x1c] sm:$0xf]
    %v549 = vld [vmem:[%s5 + $0x20] sm:$0xf]
    %v550 = vld [vmem:[%s5 + $0x24] sm:$0xf]
    %v551 = vld [vmem:[%s5 + $0x28] sm:$0xf]
    %v552 = vld [vmem:[%s5 + $0x2c] sm:$0xf]
    %v553 = vld [vmem:[%s5 + $0x30] sm:$0xf]
    %v554 = vld [vmem:[%s5 + $0x34] sm:$0xf]
    %v555 = vld [vmem:[%s5 + $0x38] sm:$0xf]
    %v556 = vld [vmem:[%s5 + $0x3c] sm:$0xf]
    %v557 = vld [vmem:[%s11 + $0x4] ss:$0 sm:$0xff]
    %v574 = vunpack.c.l.b16 %v541
    %v575 = vunpack.c.l.b16 %v542
    %v576 = vunpack.c.l.b16 %v543
    %v577 = vunpack.c.l.b16 %v544
    %v578 = vunpack.c.l.b16 %v545
    %v579 = vunpack.c.l.b16 %v546
    %v580 = vunpack.c.l.b16 %v547
    %v581 = vunpack.c.l.b16 %v548
    %v582 = vunpack.c.l.b16 %v549
    %v583 = vunpack.c.l.b16 %v550
    %v584 = vunpack.c.l.b16 %v551
    %v585 = vunpack.c.l.b16 %v552
    %v586 = vunpack.c.l.b16 %v553
    %v587 = vunpack.c.l.b16 %v554
    %v588 = vunpack.c.l.b16 %v555
    %v589 = vunpack.c.l.b16 %v556
    %v590 = vpack.c.b16 %v575, %v574
    %v591 = vpack.c.b16 %v577, %v576
    %v592 = vpack.c.b16 %v579, %v578
    %v593 = vpack.c.b16 %v581, %v580
    %v594 = vpack.c.b16 %v583, %v582
    %v595 = vpack.c.b16 %v585, %v584
    %v596 = vpack.c.b16 %v587, %v586
    %v597 = vpack.c.b16 %v589, %v588
    %606 = vmatprep.subr.bf16.mxu0 0
    %607 = vmatpush1.bf16.msra.mxu0 %v590
    %608 = vmatprep.subr.bf16.mxu0 0
    %609 = vmatpush1.bf16.msra.mxu0 %v591
    %610 = vmatprep.subr.bf16.mxu0 0
    %611 = vmatpush1.bf16.msra.mxu0 %v592
    %612 = vmatprep.subr.bf16.mxu0 0
    %613 = vmatpush1.bf16.msra.mxu0 %v593
    %614 = vmatprep.subr.bf16.mxu0 0
    %615 = vmatpush1.bf16.msra.mxu0 %v594
    %616 = vmatprep.subr.bf16.mxu0 0
    %617 = vmatpush1.bf16.msra.mxu0 %v595
    %618 = vmatprep.subr.bf16.mxu0 0
    %619 = vmatpush1.bf16.msra.mxu0 %v596
    %620 = vmatprep.subr.bf16.mxu0 0
    %621 = vmatpush1.bf16.msra.mxu0 %v597
    %622 = vmatprep.subr.bf16.mxu0 0
    %623 = vmatpush1.bf16.msra.mxu0 0
    %624 = vmatprep.subr.bf16.mxu0 0
    %625 = vmatpush1.bf16.msra.mxu0 0
    %626 = vmatprep.subr.bf16.mxu0 0
    %627 = vmatpush1.bf16.msra.mxu0 0
    %628 = vmatprep.subr.bf16.mxu0 0
    %629 = vmatpush1.bf16.msra.mxu0 0
    %630 = vmatprep.subr.bf16.mxu0 0
    %631 = vmatpush1.bf16.msra.mxu0 0
    %632 = vmatprep.subr.bf16.mxu0 0
    %633 = vmatpush1.bf16.msra.mxu0 0
    %634 = vmatprep.subr.bf16.mxu0 0
    %635 = vmatpush1.bf16.msra.mxu0 0
    %636 = vmatprep.subr.bf16.mxu0 0
    %637 = vmatpush1.bf16.msra.mxu0 0
    %638 = vmatprep.mubr.bf16.mxu0 0
    %639 = vmatmul.mubr.bf16.gmra.mrb[0].mxu0 %v540
    %v640 = vpop.f32.mrb[0].mxu0
    %v641 = vadd.f32 %v557, %v640
    %v642 = vpop.f32.mrb[0].mxu0
    %v643 = vpop.f32.mrb[0].mxu0
    %v644 = vpop.f32.mrb[0].mxu0
    %645 = vdwg.mxu0
    %646 = vst [vmem:[#allocation2] sm:$0xff] %v641
    %v647 = vpack.c.bf16 %v641, %v641
    %v648 = vld [vmem:[%s6] sm:$0xf]
    %v649 = vld [vmem:[%s6 + $0x4] sm:$0xf]
    %v650 = vld [vmem:[%s6 + $0x8] sm:$0xf]
    %v651 = vld [vmem:[%s6 + $0xc] sm:$0xf]
    %v652 = vld [vmem:[%s6 + $0x10] sm:$0xf]
    %v653 = vld [vmem:[%s6 + $0x14] sm:$0xf]
    %v654 = vld [vmem:[%s6 + $0x18] sm:$0xf]
    %v655 = vld [vmem:[%s6 + $0x1c] sm:$0xf]
    %v656 = vld [vmem:[%s6 + $0x20] sm:$0xf]
    %v657 = vld [vmem:[%s6 + $0x24] sm:$0xf]
    %v658 = vld [vmem:[%s6 + $0x28] sm:$0xf]
    %v659 = vld [vmem:[%s6 + $0x2c] sm:$0xf]
    %v660 = vld [vmem:[%s6 + $0x30] sm:$0xf]
    %v661 = vld [vmem:[%s6 + $0x34] sm:$0xf]
    %v662 = vld [vmem:[%s6 + $0x38] sm:$0xf]
    %v663 = vld [vmem:[%s6 + $0x3c] sm:$0xf]
    %v664 = vld [vmem:[%s11 + $0x5] ss:$0 sm:$0xff]
    %v681 = vunpack.c.l.b16 %v648
    %v682 = vunpack.c.l.b16 %v649
    %v683 = vunpack.c.l.b16 %v650
    %v684 = vunpack.c.l.b16 %v651
    %v685 = vunpack.c.l.b16 %v652
    %v686 = vunpack.c.l.b16 %v653
    %v687 = vunpack.c.l.b16 %v654
    %v688 = vunpack.c.l.b16 %v655
    %v689 = vunpack.c.l.b16 %v656
    %v690 = vunpack.c.l.b16 %v657
    %v691 = vunpack.c.l.b16 %v658
    %v692 = vunpack.c.l.b16 %v659
    %v693 = vunpack.c.l.b16 %v660
    %v694 = vunpack.c.l.b16 %v661
    %v695 = vunpack.c.l.b16 %v662
    %v696 = vunpack.c.l.b16 %v663
    %v697 = vpack.c.b16 %v682, %v681
    %v698 = vpack.c.b16 %v684, %v683
    %v699 = vpack.c.b16 %v686, %v685
    %v700 = vpack.c.b16 %v688, %v687
    %v701 = vpack.c.b16 %v690, %v689
    %v702 = vpack.c.b16 %v692, %v691
    %v703 = vpack.c.b16 %v694, %v693
    %v704 = vpack.c.b16 %v696, %v695
    %713 = vmatprep.subr.bf16.mxu0 0
    %714 = vmatpush1.bf16.msra.mxu0 %v697
    %715 = vmatprep.subr.bf16.mxu0 0
    %716 = vmatpush1.bf16.msra.mxu0 %v698
    %717 = vmatprep.subr.bf16.mxu0 0
    %718 = vmatpush1.bf16.msra.mxu0 %v699
    %719 = vmatprep.subr.bf16.mxu0 0
    %720 = vmatpush1.bf16.msra.mxu0 %v700
    %721 = vmatprep.subr.bf16.mxu0 0
    %722 = vmatpush1.bf16.msra.mxu0 %v701
    %723 = vmatprep.subr.bf16.mxu0 0
    %724 = vmatpush1.bf16.msra.mxu0 %v702
    %725 = vmatprep.subr.bf16.mxu0 0
    %726 = vmatpush1.bf16.msra.mxu0 %v703
    %727 = vmatprep.subr.bf16.mxu0 0
    %728 = vmatpush1.bf16.msra.mxu0 %v704
    %729 = vmatprep.subr.bf16.mxu0 0
    %730 = vmatpush1.bf16.msra.mxu0 0
    %731 = vmatprep.subr.bf16.mxu0 0
    %732 = vmatpush1.bf16.msra.mxu0 0
    %733 = vmatprep.subr.bf16.mxu0 0
    %734 = vmatpush1.bf16.msra.mxu0 0
    %735 = vmatprep.subr.bf16.mxu0 0
    %736 = vmatpush1.bf16.msra.mxu0 0
    %737 = vmatprep.subr.bf16.mxu0 0
    %738 = vmatpush1.bf16.msra.mxu0 0
    %739 = vmatprep.subr.bf16.mxu0 0
    %740 = vmatpush1.bf16.msra.mxu0 0
    %741 = vmatprep.subr.bf16.mxu0 0
    %742 = vmatpush1.bf16.msra.mxu0 0
    %743 = vmatprep.subr.bf16.mxu0 0
    %744 = vmatpush1.bf16.msra.mxu0 0
    %745 = vmatprep.mubr.bf16.mxu0 0
    %746 = vmatmul.mubr.bf16.gmra.mrb[0].mxu0 %v647
    %v747 = vpop.f32.mrb[0].mxu0
    %v748 = vadd.f32 %v664, %v747
    %v749 = vpop.f32.mrb[0].mxu0
    %v750 = vpop.f32.mrb[0].mxu0
    %v751 = vpop.f32.mrb[0].mxu0
    %752 = vdwg.mxu0
    %v753 = vmax.f32 %v748, 0.0
    %v754 = vpack.c.bf16 %v753, %v753
    %v755 = vld [vmem:[%s7] sm:$0xf]
    %v756 = vld [vmem:[%s7 + $0x4] sm:$0xf]
    %v757 = vld [vmem:[%s7 + $0x8] sm:$0xf]
    %v758 = vld [vmem:[%s7 + $0xc] sm:$0xf]
    %v759 = vld [vmem:[%s7 + $0x10] sm:$0xf]
    %v760 = vld [vmem:[%s7 + $0x14] sm:$0xf]
    %v761 = vld [vmem:[%s7 + $0x18] sm:$0xf]
    %v762 = vld [vmem:[%s7 + $0x1c] sm:$0xf]
    %v763 = vld [vmem:[%s7 + $0x20] sm:$0xf]
    %v764 = vld [vmem:[%s7 + $0x24] sm:$0xf]
    %v765 = vld [vmem:[%s7 + $0x28] sm:$0xf]
    %v766 = vld [vmem:[%s7 + $0x2c] sm:$0xf]
    %v767 = vld [vmem:[%s7 + $0x30] sm:$0xf]
    %v768 = vld [vmem:[%s7 + $0x34] sm:$0xf]
    %v769 = vld [vmem:[%s7 + $0x38] sm:$0xf]
    %v770 = vld [vmem:[%s7 + $0x3c] sm:$0xf]
    %v771 = vld [vmem:[%s11 + $0x6] ss:$0 sm:$0xff]
    %v788 = vunpack.c.l.b16 %v755
    %v789 = vunpack.c.l.b16 %v756
    %v790 = vunpack.c.l.b16 %v757
    %v791 = vunpack.c.l.b16 %v758
    %v792 = vunpack.c.l.b16 %v759
    %v793 = vunpack.c.l.b16 %v760
    %v794 = vunpack.c.l.b16 %v761
    %v795 = vunpack.c.l.b16 %v762
    %v796 = vunpack.c.l.b16 %v763
    %v797 = vunpack.c.l.b16 %v764
    %v798 = vunpack.c.l.b16 %v765
    %v799 = vunpack.c.l.b16 %v766
    %v800 = vunpack.c.l.b16 %v767
    %v801 = vunpack.c.l.b16 %v768
    %v802 = vunpack.c.l.b16 %v769
    %v803 = vunpack.c.l.b16 %v770
    %v804 = vpack.c.b16 %v789, %v788
    %v805 = vpack.c.b16 %v791, %v790
    %v806 = vpack.c.b16 %v793, %v792
    %v807 = vpack.c.b16 %v795, %v794
    %v808 = vpack.c.b16 %v797, %v796
    %v809 = vpack.c.b16 %v799, %v798
    %v810 = vpack.c.b16 %v801, %v800
    %v811 = vpack.c.b16 %v803, %v802
    %820 = vmatprep.subr.bf16.mxu0 0
    %821 = vmatpush1.bf16.msra.mxu0 %v804
    %822 = vmatprep.subr.bf16.mxu0 0
    %823 = vmatpush1.bf16.msra.mxu0 %v805
    %824 = vmatprep.subr.bf16.mxu0 0
    %825 = vmatpush1.bf16.msra.mxu0 %v806
    %826 = vmatprep.subr.bf16.mxu0 0
    %827 = vmatpush1.bf16.msra.mxu0 %v807
    %828 = vmatprep.subr.bf16.mxu0 0
    %829 = vmatpush1.bf16.msra.mxu0 %v808
    %830 = vmatprep.subr.bf16.mxu0 0
    %831 = vmatpush1.bf16.msra.mxu0 %v809
    %832 = vmatprep.subr.bf16.mxu0 0
    %833 = vmatpush1.bf16.msra.mxu0 %v810
    %834 = vmatprep.subr.bf16.mxu0 0
    %835 = vmatpush1.bf16.msra.mxu0 %v811
    %836 = vmatprep.subr.bf16.mxu0 0
    %837 = vmatpush1.bf16.msra.mxu0 0
    %838 = vmatprep.subr.bf16.mxu0 0
    %839 = vmatpush1.bf16.msra.mxu0 0
    %840 = vmatprep.subr.bf16.mxu0 0
    %841 = vmatpush1.bf16.msra.mxu0 0
    %842 = vmatprep.subr.bf16.mxu0 0
    %843 = vmatpush1.bf16.msra.mxu0 0
    %844 = vmatprep.subr.bf16.mxu0 0
    %845 = vmatpush1.bf16.msra.mxu0 0
    %846 = vmatprep.subr.bf16.mxu0 0
    %847 = vmatpush1.bf16.msra.mxu0 0
    %848 = vmatprep.subr.bf16.mxu0 0
    %849 = vmatpush1.bf16.msra.mxu0 0
    %850 = vmatprep.subr.bf16.mxu0 0
    %851 = vmatpush1.bf16.msra.mxu0 0
    %852 = vmatprep.mubr.bf16.mxu0 0
    %853 = vmatmul.mubr.bf16.gmra.mrb[0].mxu0 %v754
    %v854 = vpop.f32.mrb[0].mxu0
    %v855 = vadd.f32 %v771, %v854
    %v856 = vpop.f32.mrb[0].mxu0
    %v857 = vpop.f32.mrb[0].mxu0
    %v858 = vpop.f32.mrb[0].mxu0
    %859 = vdwg.mxu0
    %v860 = vmax.f32 %v855, 0.0
    %v861 = vpack.c.bf16 %v860, %v860
    %v862 = vld [vmem:[%s8] sm:$0xff]
    %v863 = vld [vmem:[%s8 + $0x8] sm:$0xff]
    %v864 = vld [vmem:[%s8 + $0x10] sm:$0xff]
    %v865 = vld [vmem:[%s8 + $0x18] sm:$0xff]
    %v866 = vld [vmem:[%s8 + $0x20] sm:$0xff]
    %v867 = vld [vmem:[%s8 + $0x28] sm:$0xff]
    %v868 = vld [vmem:[%s8 + $0x30] sm:$0xff]
    %v869 = vld [vmem:[%s8 + $0x38] sm:$0xff]
    %v870 = vld [vmem:[%s8 + $0x40] sm:$0xff]
    %v871 = vld [vmem:[%s8 + $0x48] sm:$0xff]
    %v872 = vld [vmem:[%s8 + $0x50] sm:$0xff]
    %v873 = vld [vmem:[%s8 + $0x58] sm:$0xff]
    %v874 = vld [vmem:[%s8 + $0x60] sm:$0xff]
    %v875 = vld [vmem:[%s8 + $0x68] sm:$0xff]
    %v876 = vld [vmem:[%s8 + $0x70] sm:$0xff]
    %v877 = vld [vmem:[%s8 + $0x78] sm:$0xff]
    %s878 = scalar_lea.vmem %s11, 7
    %v879 = vld [vmem:[%s878] ss:$8 sm:$0x3]
    %v881 = vlaneseq
    %v882 = vshrl.u32 %v881, 7
    %v883 = vsub.s32 0, %v882
    %v884 = vrot.slane %v879, %v883
    %v885 = vlaneseq
    %v886 = vshrl.u32 %v885, 7
    %v887 = vsub.s32 1, %v886
    %v888 = vrot.slane %v879, %v887
    %v907 = vunpack.c.l.b16 %v862
    %v908 = vunpack.c.h.b16 %v862
    %v909 = vunpack.c.l.b16 %v863
    %v910 = vunpack.c.h.b16 %v863
    %v911 = vunpack.c.l.b16 %v864
    %v912 = vunpack.c.h.b16 %v864
    %v913 = vunpack.c.l.b16 %v865
    %v914 = vunpack.c.h.b16 %v865
    %v915 = vunpack.c.l.b16 %v866
    %v916 = vunpack.c.h.b16 %v866
    %v917 = vunpack.c.l.b16 %v867
    %v918 = vunpack.c.h.b16 %v867
    %v919 = vunpack.c.l.b16 %v868
    %v920 = vunpack.c.h.b16 %v868
    %v921 = vunpack.c.l.b16 %v869
    %v922 = vunpack.c.h.b16 %v869
    %v923 = vunpack.c.l.b16 %v870
    %v924 = vunpack.c.h.b16 %v870
    %v925 = vunpack.c.l.b16 %v871
    %v926 = vunpack.c.h.b16 %v871
    %v927 = vunpack.c.l.b16 %v872
    %v928 = vunpack.c.h.b16 %v872
    %v929 = vunpack.c.l.b16 %v873
    %v930 = vunpack.c.h.b16 %v873
    %v931 = vunpack.c.l.b16 %v874
    %v932 = vunpack.c.h.b16 %v874
    %v933 = vunpack.c.l.b16 %v875
    %v934 = vunpack.c.h.b16 %v875
    %v935 = vunpack.c.l.b16 %v876
    %v936 = vunpack.c.h.b16 %v876
    %v937 = vunpack.c.l.b16 %v877
    %v938 = vunpack.c.h.b16 %v877
    %v939 = vpack.c.b16 %v909, %v907
    %v940 = vpack.c.b16 %v910, %v908
    %v941 = vpack.c.b16 %v913, %v911
    %v942 = vpack.c.b16 %v914, %v912
    %v943 = vpack.c.b16 %v917, %v915
    %v944 = vpack.c.b16 %v918, %v916
    %v945 = vpack.c.b16 %v921, %v919
    %v946 = vpack.c.b16 %v922, %v920
    %v947 = vpack.c.b16 %v925, %v923
    %v948 = vpack.c.b16 %v926, %v924
    %v949 = vpack.c.b16 %v929, %v927
    %v950 = vpack.c.b16 %v930, %v928
    %v951 = vpack.c.b16 %v933, %v931
    %v952 = vpack.c.b16 %v934, %v932
    %v953 = vpack.c.b16 %v937, %v935
    %v954 = vpack.c.b16 %v938, %v936
    %971 = vmatprep.subr.bf16.mxu0 %v940
    %972 = vmatpush1.bf16.msra.mxu0 %v939
    %973 = vmatprep.subr.bf16.mxu0 %v942
    %974 = vmatpush1.bf16.msra.mxu0 %v941
    %975 = vmatprep.subr.bf16.mxu0 %v944
    %976 = vmatpush1.bf16.msra.mxu0 %v943
    %977 = vmatprep.subr.bf16.mxu0 %v946
    %978 = vmatpush1.bf16.msra.mxu0 %v945
    %979 = vmatprep.subr.bf16.mxu0 %v948
    %980 = vmatpush1.bf16.msra.mxu0 %v947
    %981 = vmatprep.subr.bf16.mxu0 %v950
    %982 = vmatpush1.bf16.msra.mxu0 %v949
    %983 = vmatprep.subr.bf16.mxu0 %v952
    %984 = vmatpush1.bf16.msra.mxu0 %v951
    %985 = vmatprep.subr.bf16.mxu0 %v954
    %986 = vmatpush1.bf16.msra.mxu0 %v953
    %987 = vmatprep.subr.bf16.mxu0 0
    %988 = vmatpush1.bf16.msra.mxu0 0
    %989 = vmatprep.subr.bf16.mxu0 0
    %990 = vmatpush1.bf16.msra.mxu0 0
    %991 = vmatprep.subr.bf16.mxu0 0
    %992 = vmatpush1.bf16.msra.mxu0 0
    %993 = vmatprep.subr.bf16.mxu0 0
    %994 = vmatpush1.bf16.msra.mxu0 0
    %995 = vmatprep.subr.bf16.mxu0 0
    %996 = vmatpush1.bf16.msra.mxu0 0
    %997 = vmatprep.subr.bf16.mxu0 0
    %998 = vmatpush1.bf16.msra.mxu0 0
    %999 = vmatprep.subr.bf16.mxu0 0
    %1000 = vmatpush1.bf16.msra.mxu0 0
    %1001 = vmatprep.subr.bf16.mxu0 0
    %1002 = vmatpush1.bf16.msra.mxu0 0
    %1003 = vmatprep.mubr.bf16.mxu0 0
    %1004 = vmatmul.mubr.bf16.gmra.mrb[0].mxu0 %v861
    %v1005 = vpop.f32.mrb[0].mxu0
    %v1006 = vadd.f32 %v884, %v1005
    %v1007 = vpop.f32.mrb[0].mxu0
    %v1008 = vadd.f32 %v888, %v1007
    %v1009 = vpop.f32.mrb[0].mxu0
    %v1010 = vpop.f32.mrb[0].mxu0
    %1011 = vdwg.mxu0
    %v1012 = vmax.f32 %v1006, 0.0
    %v1013 = vmax.f32 %v1008, 0.0
    %v1014 = vpack.c.bf16 %v1012, %v1012
    %v1015 = vpack.c.bf16 %v1013, %v1013
    %v1016 = vld [vmem:[%s9] sm:$0xff]
    %v1017 = vld [vmem:[%s9 + $0x8] sm:$0xff]
    %v1018 = vld [vmem:[%s9 + $0x10] sm:$0xff]
    %v1019 = vld [vmem:[%s9 + $0x18] sm:$0xff]
    %v1020 = vld [vmem:[%s9 + $0x20] sm:$0xff]
    %v1021 = vld [vmem:[%s9 + $0x28] sm:$0xff]
    %v1022 = vld [vmem:[%s9 + $0x30] sm:$0xff]
    %v1023 = vld [vmem:[%s9 + $0x38] sm:$0xff]
    %v1024 = vld [vmem:[%s9 + $0x40] sm:$0xff]
    %v1025 = vld [vmem:[%s9 + $0x48] sm:$0xff]
    %v1026 = vld [vmem:[%s9 + $0x50] sm:$0xff]
    %v1027 = vld [vmem:[%s9 + $0x58] sm:$0xff]
    %v1028 = vld [vmem:[%s9 + $0x60] sm:$0xff]
    %v1029 = vld [vmem:[%s9 + $0x68] sm:$0xff]
    %v1030 = vld [vmem:[%s9 + $0x70] sm:$0xff]
    %v1031 = vld [vmem:[%s9 + $0x78] sm:$0xff]
    %v1032 = vld [vmem:[%s9 + $0x80] sm:$0xff]
    %v1033 = vld [vmem:[%s9 + $0x88] sm:$0xff]
    %v1034 = vld [vmem:[%s9 + $0x90] sm:$0xff]
    %v1035 = vld [vmem:[%s9 + $0x98] sm:$0xff]
    %v1036 = vld [vmem:[%s9 + $0xa0] sm:$0xff]
    %v1037 = vld [vmem:[%s9 + $0xa8] sm:$0xff]
    %v1038 = vld [vmem:[%s9 + $0xb0] sm:$0xff]
    %v1039 = vld [vmem:[%s9 + $0xb8] sm:$0xff]
    %v1040 = vld [vmem:[%s9 + $0xc0] sm:$0xff]
    %v1041 = vld [vmem:[%s9 + $0xc8] sm:$0xff]
    %v1042 = vld [vmem:[%s9 + $0xd0] sm:$0xff]
    %v1043 = vld [vmem:[%s9 + $0xd8] sm:$0xff]
    %v1044 = vld [vmem:[%s9 + $0xe0] sm:$0xff]
    %v1045 = vld [vmem:[%s9 + $0xe8] sm:$0xff]
    %v1046 = vld [vmem:[%s9 + $0xf0] sm:$0xff]
    %v1047 = vld [vmem:[%s9 + $0xf8] sm:$0xff]
    %s1048 = scalar_lea.vmem %s11, 24
    %v1049 = vld [vmem:[%s1048] ss:$8 sm:$0x3]
    %v1051 = vlaneseq
    %v1052 = vshrl.u32 %v1051, 7
    %v1053 = vsub.s32 0, %v1052
    %v1054 = vrot.slane %v1049, %v1053
    %v1055 = vlaneseq
    %v1056 = vshrl.u32 %v1055, 7
    %v1057 = vsub.s32 1, %v1056
    %v1058 = vrot.slane %v1049, %v1057
    %v1093 = vunpack.c.l.b16 %v1016
    %v1094 = vunpack.c.h.b16 %v1016
    %v1095 = vunpack.c.l.b16 %v1017
    %v1096 = vunpack.c.h.b16 %v1017
    %v1097 = vunpack.c.l.b16 %v1018
    %v1098 = vunpack.c.h.b16 %v1018
    %v1099 = vunpack.c.l.b16 %v1019
    %v1100 = vunpack.c.h.b16 %v1019
    %v1101 = vunpack.c.l.b16 %v1020
    %v1102 = vunpack.c.h.b16 %v1020
    %v1103 = vunpack.c.l.b16 %v1021
    %v1104 = vunpack.c.h.b16 %v1021
    %v1105 = vunpack.c.l.b16 %v1022
    %v1106 = vunpack.c.h.b16 %v1022
    %v1107 = vunpack.c.l.b16 %v1023
    %v1108 = vunpack.c.h.b16 %v1023
    %v1109 = vunpack.c.l.b16 %v1024
    %v1110 = vunpack.c.h.b16 %v1024
    %v1111 = vunpack.c.l.b16 %v1025
    %v1112 = vunpack.c.h.b16 %v1025
    %v1113 = vunpack.c.l.b16 %v1026
    %v1114 = vunpack.c.h.b16 %v1026
    %v1115 = vunpack.c.l.b16 %v1027
    %v1116 = vunpack.c.h.b16 %v1027
    %v1117 = vunpack.c.l.b16 %v1028
    %v1118 = vunpack.c.h.b16 %v1028
    %v1119 = vunpack.c.l.b16 %v1029
    %v1120 = vunpack.c.h.b16 %v1029
    %v1121 = vunpack.c.l.b16 %v1030
    %v1122 = vunpack.c.h.b16 %v1030
    %v1123 = vunpack.c.l.b16 %v1031
    %v1124 = vunpack.c.h.b16 %v1031
    %v1125 = vunpack.c.l.b16 %v1032
    %v1126 = vunpack.c.h.b16 %v1032
    %v1127 = vunpack.c.l.b16 %v1033
    %v1128 = vunpack.c.h.b16 %v1033
    %v1129 = vunpack.c.l.b16 %v1034
    %v1130 = vunpack.c.h.b16 %v1034
    %v1131 = vunpack.c.l.b16 %v1035
    %v1132 = vunpack.c.h.b16 %v1035
    %v1133 = vunpack.c.l.b16 %v1036
    %v1134 = vunpack.c.h.b16 %v1036
    %v1135 = vunpack.c.l.b16 %v1037
    %v1136 = vunpack.c.h.b16 %v1037
    %v1137 = vunpack.c.l.b16 %v1038
    %v1138 = vunpack.c.h.b16 %v1038
    %v1139 = vunpack.c.l.b16 %v1039
    %v1140 = vunpack.c.h.b16 %v1039
    %v1141 = vunpack.c.l.b16 %v1040
    %v1142 = vunpack.c.h.b16 %v1040
    %v1143 = vunpack.c.l.b16 %v1041
    %v1144 = vunpack.c.h.b16 %v1041
    %v1145 = vunpack.c.l.b16 %v1042
    %v1146 = vunpack.c.h.b16 %v1042
    %v1147 = vunpack.c.l.b16 %v1043
    %v1148 = vunpack.c.h.b16 %v1043
    %v1149 = vunpack.c.l.b16 %v1044
    %v1150 = vunpack.c.h.b16 %v1044
    %v1151 = vunpack.c.l.b16 %v1045
    %v1152 = vunpack.c.h.b16 %v1045
    %v1153 = vunpack.c.l.b16 %v1046
    %v1154 = vunpack.c.h.b16 %v1046
    %v1155 = vunpack.c.l.b16 %v1047
    %v1156 = vunpack.c.h.b16 %v1047
    %v1157 = vpack.c.b16 %v1095, %v1093
    %v1158 = vpack.c.b16 %v1096, %v1094
    %v1159 = vpack.c.b16 %v1099, %v1097
    %v1160 = vpack.c.b16 %v1100, %v1098
    %v1161 = vpack.c.b16 %v1103, %v1101
    %v1162 = vpack.c.b16 %v1104, %v1102
    %v1163 = vpack.c.b16 %v1107, %v1105
    %v1164 = vpack.c.b16 %v1108, %v1106
    %v1165 = vpack.c.b16 %v1111, %v1109
    %v1166 = vpack.c.b16 %v1112, %v1110
    %v1167 = vpack.c.b16 %v1115, %v1113
    %v1168 = vpack.c.b16 %v1116, %v1114
    %v1169 = vpack.c.b16 %v1119, %v1117
    %v1170 = vpack.c.b16 %v1120, %v1118
    %v1171 = vpack.c.b16 %v1123, %v1121
    %v1172 = vpack.c.b16 %v1124, %v1122
    %v1173 = vpack.c.b16 %v1127, %v1125
    %v1174 = vpack.c.b16 %v1128, %v1126
    %v1175 = vpack.c.b16 %v1131, %v1129
    %v1176 = vpack.c.b16 %v1132, %v1130
    %v1177 = vpack.c.b16 %v1135, %v1133
    %v1178 = vpack.c.b16 %v1136, %v1134
    %v1179 = vpack.c.b16 %v1139, %v1137
    %v1180 = vpack.c.b16 %v1140, %v1138
    %v1181 = vpack.c.b16 %v1143, %v1141
    %v1182 = vpack.c.b16 %v1144, %v1142
    %v1183 = vpack.c.b16 %v1147, %v1145
    %v1184 = vpack.c.b16 %v1148, %v1146
    %v1185 = vpack.c.b16 %v1151, %v1149
    %v1186 = vpack.c.b16 %v1152, %v1150
    %v1187 = vpack.c.b16 %v1155, %v1153
    %v1188 = vpack.c.b16 %v1156, %v1154
    %1221 = vmatprep.subr.bf16.mxu0 %v1158
    %1222 = vmatpush1.bf16.msra.mxu0 %v1157
    %1223 = vmatprep.subr.bf16.mxu0 %v1160
    %1224 = vmatpush1.bf16.msra.mxu0 %v1159
    %1225 = vmatprep.subr.bf16.mxu0 %v1162
    %1226 = vmatpush1.bf16.msra.mxu0 %v1161
    %1227 = vmatprep.subr.bf16.mxu0 %v1164
    %1228 = vmatpush1.bf16.msra.mxu0 %v1163
    %1229 = vmatprep.subr.bf16.mxu0 %v1166
    %1230 = vmatpush1.bf16.msra.mxu0 %v1165
    %1231 = vmatprep.subr.bf16.mxu0 %v1168
    %1232 = vmatpush1.bf16.msra.mxu0 %v1167
    %1233 = vmatprep.subr.bf16.mxu0 %v1170
    %1234 = vmatpush1.bf16.msra.mxu0 %v1169
    %1235 = vmatprep.subr.bf16.mxu0 %v1172
    %1236 = vmatpush1.bf16.msra.mxu0 %v1171
    %1237 = vmatprep.subr.bf16.mxu0 %v1174
    %1238 = vmatpush1.bf16.msra.mxu0 %v1173
    %1239 = vmatprep.subr.bf16.mxu0 %v1176
    %1240 = vmatpush1.bf16.msra.mxu0 %v1175
    %1241 = vmatprep.subr.bf16.mxu0 %v1178
    %1242 = vmatpush1.bf16.msra.mxu0 %v1177
    %1243 = vmatprep.subr.bf16.mxu0 %v1180
    %1244 = vmatpush1.bf16.msra.mxu0 %v1179
    %1245 = vmatprep.subr.bf16.mxu0 %v1182
    %1246 = vmatpush1.bf16.msra.mxu0 %v1181
    %1247 = vmatprep.subr.bf16.mxu0 %v1184
    %1248 = vmatpush1.bf16.msra.mxu0 %v1183
    %1249 = vmatprep.subr.bf16.mxu0 %v1186
    %1250 = vmatpush1.bf16.msra.mxu0 %v1185
    %1251 = vmatprep.subr.bf16.mxu0 %v1188
    %1252 = vmatpush1.bf16.msra.mxu0 %v1187
    %1253 = vmatprep.mubr.bf16.mxu0 %v1015
    %1254 = vmatmul.mubr.bf16.gmra.mrb[0].mxu0 %v1014
    %v1255 = vpop.f32.mrb[0].mxu0
    %v1256 = vadd.f32 %v1054, %v1255
    %v1257 = vpop.f32.mrb[0].mxu0
    %v1258 = vadd.f32 %v1058, %v1257
    %v1259 = vpop.f32.mrb[0].mxu0
    %v1260 = vpop.f32.mrb[0].mxu0
    %1261 = vdwg.mxu0
    %v1262 = vmax.f32 %v1256, 0.0
    %v1263 = vmax.f32 %v1258, 0.0
    %v1264 = vpack.c.bf16 %v1262, %v1262
    %v1265 = vpack.c.bf16 %v1263, %v1263
    %v1266 = vld [vmem:[%s10] sm:$0xff]
    %v1267 = vld [vmem:[%s10 + $0x8] sm:$0xf]
    %v1268 = vld [vmem:[%s10 + $0xc] sm:$0xff]
    %v1269 = vld [vmem:[%s10 + $0x14] sm:$0xf]
    %v1270 = vld [vmem:[%s10 + $0x18] sm:$0xff]
    %v1271 = vld [vmem:[%s10 + $0x20] sm:$0xf]
    %v1272 = vld [vmem:[%s10 + $0x24] sm:$0xff]
    %v1273 = vld [vmem:[%s10 + $0x2c] sm:$0xf]
    %v1274 = vld [vmem:[%s10 + $0x30] sm:$0xff]
    %v1275 = vld [vmem:[%s10 + $0x38] sm:$0xf]
    %v1276 = vld [vmem:[%s10 + $0x3c] sm:$0xff]
    %v1277 = vld [vmem:[%s10 + $0x44] sm:$0xf]
    %v1278 = vld [vmem:[%s10 + $0x48] sm:$0xff]
    %v1279 = vld [vmem:[%s10 + $0x50] sm:$0xf]
    %v1280 = vld [vmem:[%s10 + $0x54] sm:$0xff]
    %v1281 = vld [vmem:[%s10 + $0x5c] sm:$0xf]
    %v1282 = vld [vmem:[%s10 + $0x60] sm:$0xff]
    %v1283 = vld [vmem:[%s10 + $0x68] sm:$0xf]
    %v1284 = vld [vmem:[%s10 + $0x6c] sm:$0xff]
    %v1285 = vld [vmem:[%s10 + $0x74] sm:$0xf]
    %v1286 = vld [vmem:[%s10 + $0x78] sm:$0xff]
    %v1287 = vld [vmem:[%s10 + $0x80] sm:$0xf]
    %v1288 = vld [vmem:[%s10 + $0x84] sm:$0xff]
    %v1289 = vld [vmem:[%s10 + $0x8c] sm:$0xf]
    %v1290 = vld [vmem:[%s10 + $0x90] sm:$0xff]
    %v1291 = vld [vmem:[%s10 + $0x98] sm:$0xf]
    %v1292 = vld [vmem:[%s10 + $0x9c] sm:$0xff]
    %v1293 = vld [vmem:[%s10 + $0xa4] sm:$0xf]
    %v1294 = vld [vmem:[%s10 + $0xa8] sm:$0xff]
    %v1295 = vld [vmem:[%s10 + $0xb0] sm:$0xf]
    %v1296 = vld [vmem:[%s10 + $0xb4] sm:$0xff]
    %v1297 = vld [vmem:[%s10 + $0xbc] sm:$0xf]
    %v1298 = vld [vmem:[%s10 + $0xc0] sm:$0xff]
    %v1299 = vld [vmem:[%s10 + $0xc8] sm:$0xf]
    %v1300 = vld [vmem:[%s10 + $0xcc] sm:$0xff]
    %v1301 = vld [vmem:[%s10 + $0xd4] sm:$0xf]
    %v1302 = vld [vmem:[%s10 + $0xd8] sm:$0xff]
    %v1303 = vld [vmem:[%s10 + $0xe0] sm:$0xf]
    %v1304 = vld [vmem:[%s10 + $0xe4] sm:$0xff]
    %v1305 = vld [vmem:[%s10 + $0xec] sm:$0xf]
    %v1306 = vld [vmem:[%s10 + $0xf0] sm:$0xff]
    %v1307 = vld [vmem:[%s10 + $0xf8] sm:$0xf]
    %v1308 = vld [vmem:[%s10 + $0xfc] sm:$0xff]
    %v1309 = vld [vmem:[%s10 + $0x104] sm:$0xf]
    %v1310 = vld [vmem:[%s10 + $0x108] sm:$0xff]
    %v1311 = vld [vmem:[%s10 + $0x110] sm:$0xf]
    %v1312 = vld [vmem:[%s10 + $0x114] sm:$0xff]
    %v1313 = vld [vmem:[%s10 + $0x11c] sm:$0xf]
    %v1314 = vld [vmem:[%s10 + $0x120] sm:$0xff]
    %v1315 = vld [vmem:[%s10 + $0x128] sm:$0xf]
    %v1316 = vld [vmem:[%s10 + $0x12c] sm:$0xff]
    %v1317 = vld [vmem:[%s10 + $0x134] sm:$0xf]
    %v1318 = vld [vmem:[%s10 + $0x138] sm:$0xff]
    %v1319 = vld [vmem:[%s10 + $0x140] sm:$0xf]
    %v1320 = vld [vmem:[%s10 + $0x144] sm:$0xff]
    %v1321 = vld [vmem:[%s10 + $0x14c] sm:$0xf]
    %v1322 = vld [vmem:[%s10 + $0x150] sm:$0xff]
    %v1323 = vld [vmem:[%s10 + $0x158] sm:$0xf]
    %v1324 = vld [vmem:[%s10 + $0x15c] sm:$0xff]
    %v1325 = vld [vmem:[%s10 + $0x164] sm:$0xf]
    %v1326 = vld [vmem:[%s10 + $0x168] sm:$0xff]
    %v1327 = vld [vmem:[%s10 + $0x170] sm:$0xf]
    %v1328 = vld [vmem:[%s10 + $0x174] sm:$0xff]
    %v1329 = vld [vmem:[%s10 + $0x17c] sm:$0xf]
    %s1330 = scalar_lea.vmem %s11, 25
    %v1331 = vld [vmem:[%s1330] ss:$8 sm:$0x7]
    %v1333 = vlaneseq
    %v1334 = vshrl.u32 %v1333, 7
    %v1335 = vsub.s32 0, %v1334
    %v1336 = vrot.slane %v1331, %v1335
    %v1337 = vlaneseq
    %v1338 = vshrl.u32 %v1337, 7
    %v1339 = vsub.s32 1, %v1338
    %v1340 = vrot.slane %v1331, %v1339
    %v1341 = vlaneseq
    %v1342 = vshrl.u32 %v1341, 7
    %v1343 = vsub.s32 2, %v1342
    %v1344 = vrot.slane %v1331, %v1343
    %v1412 = vunpack.c.l.b16 %v1266
    %v1413 = vunpack.c.h.b16 %v1266
    %v1414 = vunpack.c.l.b16 %v1267
    %v1415 = vunpack.c.l.b16 %v1268
    %v1416 = vunpack.c.h.b16 %v1268
    %v1417 = vunpack.c.l.b16 %v1269
    %v1418 = vunpack.c.l.b16 %v1270
    %v1419 = vunpack.c.h.b16 %v1270
    %v1420 = vunpack.c.l.b16 %v1271
    %v1421 = vunpack.c.l.b16 %v1272
    %v1422 = vunpack.c.h.b16 %v1272
    %v1423 = vunpack.c.l.b16 %v1273
    %v1424 = vunpack.c.l.b16 %v1274
    %v1425 = vunpack.c.h.b16 %v1274
    %v1426 = vunpack.c.l.b16 %v1275
    %v1427 = vunpack.c.l.b16 %v1276
    %v1428 = vunpack.c.h.b16 %v1276
    %v1429 = vunpack.c.l.b16 %v1277
    %v1430 = vunpack.c.l.b16 %v1278
    %v1431 = vunpack.c.h.b16 %v1278
    %v1432 = vunpack.c.l.b16 %v1279
    %v1433 = vunpack.c.l.b16 %v1280
    %v1434 = vunpack.c.h.b16 %v1280
    %v1435 = vunpack.c.l.b16 %v1281
    %v1436 = vunpack.c.l.b16 %v1282
    %v1437 = vunpack.c.h.b16 %v1282
    %v1438 = vunpack.c.l.b16 %v1283
    %v1439 = vunpack.c.l.b16 %v1284
    %v1440 = vunpack.c.h.b16 %v1284
    %v1441 = vunpack.c.l.b16 %v1285
    %v1442 = vunpack.c.l.b16 %v1286
    %v1443 = vunpack.c.h.b16 %v1286
    %v1444 = vunpack.c.l.b16 %v1287
    %v1445 = vunpack.c.l.b16 %v1288
    %v1446 = vunpack.c.h.b16 %v1288
    %v1447 = vunpack.c.l.b16 %v1289
    %v1448 = vunpack.c.l.b16 %v1290
    %v1449 = vunpack.c.h.b16 %v1290
    %v1450 = vunpack.c.l.b16 %v1291
    %v1451 = vunpack.c.l.b16 %v1292
    %v1452 = vunpack.c.h.b16 %v1292
    %v1453 = vunpack.c.l.b16 %v1293
    %v1454 = vunpack.c.l.b16 %v1294
    %v1455 = vunpack.c.h.b16 %v1294
    %v1456 = vunpack.c.l.b16 %v1295
    %v1457 = vunpack.c.l.b16 %v1296
    %v1458 = vunpack.c.h.b16 %v1296
    %v1459 = vunpack.c.l.b16 %v1297
    %v1460 = vunpack.c.l.b16 %v1298
    %v1461 = vunpack.c.h.b16 %v1298
    %v1462 = vunpack.c.l.b16 %v1299
    %v1463 = vunpack.c.l.b16 %v1300
    %v1464 = vunpack.c.h.b16 %v1300
    %v1465 = vunpack.c.l.b16 %v1301
    %v1466 = vunpack.c.l.b16 %v1302
    %v1467 = vunpack.c.h.b16 %v1302
    %v1468 = vunpack.c.l.b16 %v1303
    %v1469 = vunpack.c.l.b16 %v1304
    %v1470 = vunpack.c.h.b16 %v1304
    %v1471 = vunpack.c.l.b16 %v1305
    %v1472 = vunpack.c.l.b16 %v1306
    %v1473 = vunpack.c.h.b16 %v1306
    %v1474 = vunpack.c.l.b16 %v1307
    %v1475 = vunpack.c.l.b16 %v1308
    %v1476 = vunpack.c.h.b16 %v1308
    %v1477 = vunpack.c.l.b16 %v1309
    %v1478 = vunpack.c.l.b16 %v1310
    %v1479 = vunpack.c.h.b16 %v1310
    %v1480 = vunpack.c.l.b16 %v1311
    %v1481 = vunpack.c.l.b16 %v1312
    %v1482 = vunpack.c.h.b16 %v1312
    %v1483 = vunpack.c.l.b16 %v1313
    %v1484 = vunpack.c.l.b16 %v1314
    %v1485 = vunpack.c.h.b16 %v1314
    %v1486 = vunpack.c.l.b16 %v1315
    %v1487 = vunpack.c.l.b16 %v1316
    %v1488 = vunpack.c.h.b16 %v1316
    %v1489 = vunpack.c.l.b16 %v1317
    %v1490 = vunpack.c.l.b16 %v1318
    %v1491 = vunpack.c.h.b16 %v1318
    %v1492 = vunpack.c.l.b16 %v1319
    %v1493 = vunpack.c.l.b16 %v1320
    %v1494 = vunpack.c.h.b16 %v1320
    %v1495 = vunpack.c.l.b16 %v1321
    %v1496 = vunpack.c.l.b16 %v1322
    %v1497 = vunpack.c.h.b16 %v1322
    %v1498 = vunpack.c.l.b16 %v1323
    %v1499 = vunpack.c.l.b16 %v1324
    %v1500 = vunpack.c.h.b16 %v1324
    %v1501 = vunpack.c.l.b16 %v1325
    %v1502 = vunpack.c.l.b16 %v1326
    %v1503 = vunpack.c.h.b16 %v1326
    %v1504 = vunpack.c.l.b16 %v1327
    %v1505 = vunpack.c.l.b16 %v1328
    %v1506 = vunpack.c.h.b16 %v1328
    %v1507 = vunpack.c.l.b16 %v1329
    %v1508 = vpack.c.b16 %v1415, %v1412
    %v1509 = vpack.c.b16 %v1416, %v1413
    %v1510 = vpack.c.b16 %v1417, %v1414
    %v1511 = vpack.c.b16 %v1421, %v1418
    %v1512 = vpack.c.b16 %v1422, %v1419
    %v1513 = vpack.c.b16 %v1423, %v1420
    %v1514 = vpack.c.b16 %v1427, %v1424
    %v1515 = vpack.c.b16 %v1428, %v1425
    %v1516 = vpack.c.b16 %v1429, %v1426
    %v1517 = vpack.c.b16 %v1433, %v1430
    %v1518 = vpack.c.b16 %v1434, %v1431
    %v1519 = vpack.c.b16 %v1435, %v1432
    %v1520 = vpack.c.b16 %v1439, %v1436
    %v1521 = vpack.c.b16 %v1440, %v1437
    %v1522 = vpack.c.b16 %v1441, %v1438
    %v1523 = vpack.c.b16 %v1445, %v1442
    %v1524 = vpack.c.b16 %v1446, %v1443
    %v1525 = vpack.c.b16 %v1447, %v1444
    %v1526 = vpack.c.b16 %v1451, %v1448
    %v1527 = vpack.c.b16 %v1452, %v1449
    %v1528 = vpack.c.b16 %v1453, %v1450
    %v1529 = vpack.c.b16 %v1457, %v1454
    %v1530 = vpack.c.b16 %v1458, %v1455
    %v1531 = vpack.c.b16 %v1459, %v1456
    %v1532 = vpack.c.b16 %v1463, %v1460
    %v1533 = vpack.c.b16 %v1464, %v1461
    %v1534 = vpack.c.b16 %v1465, %v1462
    %v1535 = vpack.c.b16 %v1469, %v1466
    %v1536 = vpack.c.b16 %v1470, %v1467
    %v1537 = vpack.c.b16 %v1471, %v1468
    %v1538 = vpack.c.b16 %v1475, %v1472
    %v1539 = vpack.c.b16 %v1476, %v1473
    %v1540 = vpack.c.b16 %v1477, %v1474
    %v1541 = vpack.c.b16 %v1481, %v1478
    %v1542 = vpack.c.b16 %v1482, %v1479
    %v1543 = vpack.c.b16 %v1483, %v1480
    %v1544 = vpack.c.b16 %v1487, %v1484
    %v1545 = vpack.c.b16 %v1488, %v1485
    %v1546 = vpack.c.b16 %v1489, %v1486
    %v1547 = vpack.c.b16 %v1493, %v1490
    %v1548 = vpack.c.b16 %v1494, %v1491
    %v1549 = vpack.c.b16 %v1495, %v1492
    %v1550 = vpack.c.b16 %v1499, %v1496
    %v1551 = vpack.c.b16 %v1500, %v1497
    %v1552 = vpack.c.b16 %v1501, %v1498
    %v1553 = vpack.c.b16 %v1505, %v1502
    %v1554 = vpack.c.b16 %v1506, %v1503
    %v1555 = vpack.c.b16 %v1507, %v1504
    %1604 = vmatprep.subr.bf16.mxu0 %v1509
    %1605 = vmatpush1.bf16.msra.mxu0 %v1508
    %1606 = vmatprep.subr.bf16.mxu0 %v1512
    %1607 = vmatpush1.bf16.msra.mxu0 %v1511
    %1608 = vmatprep.subr.bf16.mxu0 %v1515
    %1609 = vmatpush1.bf16.msra.mxu0 %v1514
    %1610 = vmatprep.subr.bf16.mxu0 %v1518
    %1611 = vmatpush1.bf16.msra.mxu0 %v1517
    %1612 = vmatprep.subr.bf16.mxu0 %v1521
    %1613 = vmatpush1.bf16.msra.mxu0 %v1520
    %1614 = vmatprep.subr.bf16.mxu0 %v1524
    %1615 = vmatpush1.bf16.msra.mxu0 %v1523
    %1616 = vmatprep.subr.bf16.mxu0 %v1527
    %1617 = vmatpush1.bf16.msra.mxu0 %v1526
    %1618 = vmatprep.subr.bf16.mxu0 %v1530
    %1619 = vmatpush1.bf16.msra.mxu0 %v1529
    %1620 = vmatprep.subr.bf16.mxu0 %v1533
    %1621 = vmatpush1.bf16.msra.mxu0 %v1532
    %1622 = vmatprep.subr.bf16.mxu0 %v1536
    %1623 = vmatpush1.bf16.msra.mxu0 %v1535
    %1624 = vmatprep.subr.bf16.mxu0 %v1539
    %1625 = vmatpush1.bf16.msra.mxu0 %v1538
    %1626 = vmatprep.subr.bf16.mxu0 %v1542
    %1627 = vmatpush1.bf16.msra.mxu0 %v1541
    %1628 = vmatprep.subr.bf16.mxu0 %v1545
    %1629 = vmatpush1.bf16.msra.mxu0 %v1544
    %1630 = vmatprep.subr.bf16.mxu0 %v1548
    %1631 = vmatpush1.bf16.msra.mxu0 %v1547
    %1632 = vmatprep.subr.bf16.mxu0 %v1551
    %1633 = vmatpush1.bf16.msra.mxu0 %v1550
    %1634 = vmatprep.subr.bf16.mxu0 %v1554
    %1635 = vmatpush1.bf16.msra.mxu0 %v1553
    %1636 = vmatprep.mubr.bf16.mxu0 %v1265
    %1637 = vmatmul.mubr.bf16.gmra.mrb[0].mxu0 %v1264
    %v1638 = vpop.f32.mrb[0].mxu0
    %v1639 = vadd.f32 %v1336, %v1638
    %v1640 = vpop.f32.mrb[0].mxu0
    %v1641 = vadd.f32 %v1340, %v1640
    %v1642 = vpop.f32.mrb[0].mxu0
    %v1643 = vpop.f32.mrb[0].mxu0
    %1644 = vdwg.mxu0
    %1645 = vmatprep.subr.bf16.mxu0 0
    %1646 = vmatpush1.bf16.msra.mxu0 %v1510
    %1647 = vmatprep.subr.bf16.mxu0 0
    %1648 = vmatpush1.bf16.msra.mxu0 %v1513
    %1649 = vmatprep.subr.bf16.mxu0 0
    %1650 = vmatpush1.bf16.msra.mxu0 %v1516
    %1651 = vmatprep.subr.bf16.mxu0 0
    %1652 = vmatpush1.bf16.msra.mxu0 %v1519
    %1653 = vmatprep.subr.bf16.mxu0 0
    %1654 = vmatpush1.bf16.msra.mxu0 %v1522
    %1655 = vmatprep.subr.bf16.mxu0 0
    %1656 = vmatpush1.bf16.msra.mxu0 %v1525
    %1657 = vmatprep.subr.bf16.mxu0 0
    %1658 = vmatpush1.bf16.msra.mxu0 %v1528
    %1659 = vmatprep.subr.bf16.mxu0 0
    %1660 = vmatpush1.bf16.msra.mxu0 %v1531
    %1661 = vmatprep.subr.bf16.mxu0 0
    %1662 = vmatpush1.bf16.msra.mxu0 %v1534
    %1663 = vmatprep.subr.bf16.mxu0 0
    %1664 = vmatpush1.bf16.msra.mxu0 %v1537
    %1665 = vmatprep.subr.bf16.mxu0 0
    %1666 = vmatpush1.bf16.msra.mxu0 %v1540
    %1667 = vmatprep.subr.bf16.mxu0 0
    %1668 = vmatpush1.bf16.msra.mxu0 %v1543
    %1669 = vmatprep.subr.bf16.mxu0 0
    %1670 = vmatpush1.bf16.msra.mxu0 %v1546
    %1671 = vmatprep.subr.bf16.mxu0 0
    %1672 = vmatpush1.bf16.msra.mxu0 %v1549
    %1673 = vmatprep.subr.bf16.mxu0 0
    %1674 = vmatpush1.bf16.msra.mxu0 %v1552
    %1675 = vmatprep.subr.bf16.mxu0 0
    %1676 = vmatpush1.bf16.msra.mxu0 %v1555
    %1677 = vmatprep.mubr.bf16.mxu0 %v1265
    %1678 = vmatmul.mubr.bf16.gmra.mrb[0].mxu0 %v1264
    %v1679 = vpop.f32.mrb[0].mxu0
    %v1680 = vadd.f32 %v1344, %v1679
    %v1681 = vpop.f32.mrb[0].mxu0
    %v1682 = vpop.f32.mrb[0].mxu0
    %v1683 = vpop.f32.mrb[0].mxu0
    %1684 = vdwg.mxu0
    %1685 = vst [vmem:[%s13] sm:$0xff] %v1639
    %1686 = vst [vmem:[%s13 + $0x8] sm:$0xff] %v1641
    %1687 = vst [vmem:[%s13 + $0x10] sm:$0xff] %v1680
    // Predicated region
    $region50: #{_lambda_.1} parent=1 // pred_check
      _
    $region51: #{_lambda_.1} parent=1 // pred_check_branch
      %1689 = sbr.rel (0) target = $region53
    $region52: #{_lambda_.1} parent=1 // pred_region
      %s1691 = ssub.s32 128, 128
      %1692 = vsyncadd [#allocation3], %s1691
      %s1694 = sshll.u32 [#allocation2], 4
      %s1695 = int_to_ptr.vmem [resolvable:$true] %s1694
      %1697 = dma.vmem_to_hbm [thread:$0]  %s1695, 128, %s12, [#allocation3]
    $region53: #{_lambda_.1} parent=1 // pred_fallthru
      _
    // Predicated region
    $region54: #{_lambda_.1} parent=1 // pred_check
      _
    $region55: #{_lambda_.1} parent=1 // pred_check_branch
      %1699 = sbr.rel (0) target = $region57
    $region56: #{_lambda_.1} parent=1 // pred_region
      _
    $region57: #{_lambda_.1} parent=1 // pred_fallthru
      _
    // Predicated region
    $region58: #{_lambda_.1} parent=1 // pred_check
      _
    $region59: #{_lambda_.1} parent=1 // pred_check_branch
      %1701 = sbr.rel (0) target = $region61
    $region60: #{_lambda_.1} parent=1 // pred_region
      %1702 = dma.done [#allocation3], 128
    $region61: #{_lambda_.1} parent=1 // pred_fallthru
      _
    // Predicated region
    $region62: #{_lambda_.1} parent=1 // pred_check
      _
    $region63: #{_lambda_.1} parent=1 // pred_check_branch
      %1704 = sbr.rel (0) target = $region65
    $region64: #{_lambda_.1} parent=1 // pred_region
      _
    $region65: #{_lambda_.1} parent=1 // pred_fallthru
      _
    %1705 = vsyncpa [#allocation3], 1

</llo_original>
